<compile_context>
chip_gen: v7x
topology: tpu7x:2x2x1
jax: 0.10.0
libtpu: 0.0.40
codegen_flags: <defaults>
</compile_context>

<pallas_src>
from functools import partial

import jax
import jax.numpy as jnp
from jax.experimental import pallas as pl
from jax.experimental.pallas import tpu as pltpu


def _round_up(x, m):
    return (x + m - 1) // m * m


# ----------------------------------------------------------------------------
# Pallas kernel: tiled matmul + optional bias + optional ReLU (f32 accumulation)
# ----------------------------------------------------------------------------
def _matmul_bias_act_kernel(*refs, apply_relu, has_bias):
    if has_bias:
        a_ref, w_ref, b_ref, o_ref, acc_ref = refs
    else:
        a_ref, w_ref, o_ref, acc_ref = refs
        b_ref = None

    @pl.when(pl.program_id(2) == 0)
    def _init():
        acc_ref[...] = jnp.zeros_like(acc_ref)

    acc_ref[...] += jnp.dot(a_ref[...], w_ref[...],
                            preferred_element_type=jnp.float32)

    @pl.when(pl.program_id(2) == pl.num_programs(2) - 1)
    def _finalize():
        res = acc_ref[...]
        if has_bias:
            res = res + b_ref[...]               # (1, tn) broadcast over rows
        if apply_relu:
            res = jnp.maximum(res, 0.0)
        o_ref[...] = res.astype(o_ref.dtype)


def matmul_bias_act(a, w, b=None, apply_relu=False, *,
                    out_dtype=jnp.float32,
                    tm_max=512, tn_max=256, tk_max=512,
                    compute_dtype=jnp.bfloat16):
    """out = act(a @ w [+ b]). a:(M,K), w:(K,N), b:(N,) -> (M,N) out_dtype.

    Inputs are zero-padded to (tm, tk, tn) tile multiples and cast to bf16 at
    the pallas_call boundary; accumulation, bias add and ReLU stay in f32.
    Tile VMEM footprint stays well under the scoped limit on v5e / v6e / v7x,
    keeping double-buffered pipelining alive.
    """
    M, K = a.shape
    K2, N = w.shape
    assert K == K2
    has_bias = b is not None

    tm = min(tm_max, _round_up(M, 8))        # sublane axis: multiple of 8
    tn = min(tn_max, _round_up(N, 128))      # lane axis: multiple of 128
    tk = min(tk_max, _round_up(K, 128))      # lane axis of A: multiple of 128
    Mp, Kp, Np = _round_up(M, tm), _round_up(K, tk), _round_up(N, tn)

    a_p = jnp.pad(a, ((0, Mp - M), (0, Kp - K))).astype(compute_dtype)
    w_p = jnp.pad(w, ((0, Kp - K), (0, Np - N))).astype(compute_dtype)

    in_specs = [
        pl.BlockSpec((tm, tk), lambda i, j, k: (i, k)),
        pl.BlockSpec((tk, tn), lambda i, j, k: (k, j)),
    ]
    args = [a_p, w_p]
    if has_bias:
        b_p = jnp.pad(b.astype(jnp.float32), (0, Np - N)).reshape(1, Np)
        in_specs.append(pl.BlockSpec((1, tn), lambda i, j, k: (0, j)))
        args.append(b_p)

    grid = (Mp // tm, Np // tn, Kp // tk)
    out = pl.pallas_call(
        partial(_matmul_bias_act_kernel, apply_relu=apply_relu,
                has_bias=has_bias),
        out_shape=jax.ShapeDtypeStruct((Mp, Np), out_dtype),
        grid_spec=pltpu.PrefetchScalarGridSpec(
            num_scalar_prefetch=0,
            grid=grid,
            in_specs=in_specs,
            out_specs=pl.BlockSpec((tm, tn), lambda i, j, k: (i, j)),
            scratch_shapes=[pltpu.VMEM((tm, tn), jnp.float32)],
        ),
        compiler_params=pltpu.CompilerParams(
            dimension_semantics=("parallel", "parallel", "arbitrary"),
            vmem_limit_bytes=32 * 1024 * 1024,
        ),
    )(*args)
    return out[:M, :N]


# ----------------------------------------------------------------------------
# Bilinear resize (align_corners=False) as Pallas matmul(s)
# ----------------------------------------------------------------------------
def _interp_matrix(out_size, in_size):
    # Matches F.interpolate(..., mode='bilinear', align_corners=False)
    scale = in_size / out_size
    i = jnp.arange(out_size, dtype=jnp.float32)
    src = jnp.clip((i + 0.5) * scale - 0.5, 0.0, float(in_size - 1))
    i0 = jnp.floor(src).astype(jnp.int32)
    i1 = jnp.minimum(i0 + 1, in_size - 1)
    w1 = src - i0.astype(jnp.float32)
    A = jnp.zeros((out_size, in_size), dtype=jnp.float32)
    A = A.at[jnp.arange(out_size), i0].add(1.0 - w1)
    A = A.at[jnp.arange(out_size), i1].add(w1)
    return A


def bilinear_resize(x_bchw, out_h, out_w):
    B, C, h, w = x_bchw.shape
    ah = _interp_matrix(out_h, h)            # (H_out, h)
    aw = _interp_matrix(out_w, w)            # (W_out, w)

    if h * w * out_h * out_w <= (1 << 20):
        # Small spatial sizes: fuse H- and W-interp into one Kronecker operator
        # and do the whole resize in a single lane-dense matmul:
        #   (B*C, h*w) @ (h*w, H_out*W_out)
        akron = (ah[:, None, :, None] * aw[None, :, None, :]).reshape(
            out_h * out_w, h * w)                                  # (HW_out, hw)
        o = matmul_bias_act(x_bchw.reshape(B * C, h * w), akron.T)  # (B*C, HW_out)
        return o.reshape(B, C, out_h, out_w)

    # Fallback for large resolutions: separable two-matmul path.
    t = matmul_bias_act(x_bchw.reshape(B * C * h, w), aw.T)        # (B*C*h, W)
    t = t.reshape(B * C, h, out_w).transpose(1, 0, 2).reshape(h, B * C * out_w)
    o = matmul_bias_act(ah, t)                                     # (H, B*C*W)
    o = o.reshape(out_h, B * C, out_w).transpose(1, 0, 2)
    return o.reshape(B, C, out_h, out_w)


# ----------------------------------------------------------------------------
# Conv2d (NCHW) = im2col (XLA glue) + tiled Pallas fused matmul
# ----------------------------------------------------------------------------
def conv2d(x, w, b, stride=1, pad=0, relu=False, out_dtype=jnp.float32):
    # TODO(synk): move im2col into the Pallas kernel (accumulate kh*kw shifted
    # NHWC matmuls in VMEM) to avoid the 9x patch materialization in HBM at
    # real resolutions; at these toy sizes the XLA glue is negligible.
    B, Cin, H, W = x.shape
    Cout, Cin_w, kh, kw = w.shape
    assert Cin == Cin_w
    xp = jnp.pad(x, ((0, 0), (0, 0), (pad, pad), (pad, pad)))
    Ho = (H + 2 * pad - kh) // stride + 1
    Wo = (W + 2 * pad - kw) // stride + 1
    cols = []
    for i in range(kh):
        for j in range(kw):
            cols.append(
                xp[:, :, i:i + stride * (Ho - 1) + 1:stride,
                         j:j + stride * (Wo - 1) + 1:stride])
    patches = jnp.stack(cols, axis=2)                 # (B, Cin, kh*kw, Ho, Wo)
    patches = patches.transpose(0, 3, 4, 1, 2).reshape(B * Ho * Wo, Cin * kh * kw)
    wmat = w.reshape(Cout, Cin * kh * kw).T           # (Cin*kh*kw, Cout)
    out = matmul_bias_act(patches, wmat, b, relu, out_dtype=out_dtype)
    return out.reshape(B, Ho, Wo, Cout).transpose(0, 3, 1, 2)


# ----------------------------------------------------------------------------
# Synthetic DeepLabV3Plus (eval-mode forward)
# ----------------------------------------------------------------------------
def init_params(key, c_in=4, num_classes=3):
    ks = jax.random.split(key, 8)

    def w(k, shape, scale=0.1):
        return scale * jax.random.normal(k, shape, dtype=jnp.float32)

    return {
        # backbone: two stride-2 3x3 convs (+ReLU)
        "bb_w1": w(ks[0], (8, c_in, 3, 3)), "bb_b1": w(ks[1], (8,)),
        "bb_w2": w(ks[2], (16, 8, 3, 3)),   "bb_b2": w(ks[3], (16,)),
        # classifier head: 3x3 conv (+ReLU) + 1x1 conv -> num_classes
        "cl_w1": w(ks[4], (16, 16, 3, 3)),  "cl_b1": w(ks[5], (16,)),
        "cl_w2": w(ks[6], (num_classes, 16, 1, 1)), "cl_b2": w(ks[7], (num_classes,)),
    }


def deeplabv3plus_forward(params, x):
    input_h, input_w = x.shape[-2], x.shape[-1]
    bf16 = jnp.bfloat16  # intermediates are re-cast to bf16 at the next matmul
    # backbone
    f = conv2d(x, params["bb_w1"], params["bb_b1"], stride=2, pad=1, relu=True,
               out_dtype=bf16)
    f = conv2d(f, params["bb_w2"], params["bb_b2"], stride=2, pad=1, relu=True,
               out_dtype=bf16)
    # classifier
    y = conv2d(f, params["cl_w1"], params["cl_b1"], stride=1, pad=1, relu=True,
               out_dtype=bf16)
    y = conv2d(y, params["cl_w2"], params["cl_b2"], stride=1, pad=0, relu=False,
               out_dtype=bf16)
    # bilinear upsample to input resolution (align_corners=False); f32 output
    y = bilinear_resize(y, input_h, input_w)
    # eval mode (not self.training): return only the main output
    # TODO(synk): aux_classifier branch (training mode) not exercised here.
    # TODO(synk): at these toy sizes all layers could be fused into a single
    # pallas_call with VMEM-resident intermediates to drop launch overheads.
    return y


if __name__ == "__main__":
    key = jax.random.PRNGKey(0)
    pkey, xkey = jax.random.split(key)
    params = init_params(pkey, c_in=4, num_classes=3)
    x = jax.random.normal(xkey, (2, 4, 16, 16), dtype=jnp.float32)

    fwd = jax.jit(deeplabv3plus_forward)
    out = fwd(params, x)
    out = jax.block_until_ready(out)
    assert out.shape == (2, 3, 16, 16), out.shape
    assert out.dtype == jnp.float32
    assert bool(jnp.all(jnp.isfinite(out)))
    print("KERNEL_OK")
</pallas_src>

<mosaic_0001>
module attributes {stable_mosaic.version = 11 : i64} {
  func.func private @main(%arg0: i32) attributes {dimension_semantics = [#tpu.dimension_semantics<core_parallel>], iteration_bounds = array<i64: 2>, tpu.core_type = #tpu.core_type<sc_scalar_subcore>, window_params = []} {
    return
  }
}

module attributes {stable_mosaic.version = 11 : i64} {
  func.func private @main(%arg0: i32) attributes {dimension_semantics = [#tpu.dimension_semantics<core_parallel>], iteration_bounds = array<i64: 2>, tpu.core_type = #tpu.core_type<sc_scalar_subcore>, window_params = []} {
    return
  }
}

module attributes {stable_mosaic.version = 11 : i64} {
  func.func @_matmul_bias_act_kernel(%arg0: i32, %arg1: i32, %arg2: i32, %arg3: memref<128x128xbf16, #tpu.memory_space<vmem>>, %arg4: memref<128x128xbf16, #tpu.memory_space<vmem>>, %arg5: memref<1x128xf32, #tpu.memory_space<vmem>>, %arg6: memref<128x128xbf16, #tpu.memory_space<vmem>>, %arg7: memref<128x128xf32, #tpu.memory_space<vmem>>) attributes {dimension_semantics = [#tpu.dimension_semantics<parallel>, #tpu.dimension_semantics<parallel>, #tpu.dimension_semantics<arbitrary>], iteration_bounds = array<i64: 1, 1, 1>, scalar_prefetch = 0 : i64, scratch_operands = 1 : i64, tpu.core_type = #tpu.core_type<tc>, window_params = [{transform_indices = @transform_0, window_bounds = array<i64: 128, 128>}, {transform_indices = @transform_1, window_bounds = array<i64: 128, 128>}, {transform_indices = @transform_2, window_bounds = array<i64: 1, 128>}, {transform_indices = @transform_3, window_bounds = array<i64: 128, 128>}]} {
    %c0_i32 = arith.constant 0 : i32
    %0 = arith.cmpi eq, %arg2, %c0_i32 : i32
    %1 = arith.extui %0 : i1 to i32
    %c0_i32_0 = arith.constant 0 : i32
    %2 = arith.cmpi ne, %1, %c0_i32_0 : i32
    scf.if %2 {
      %cst_10 = arith.constant 0.000000e+00 : f32
      %12 = vector.broadcast %cst_10 : f32 to vector<128x128xf32>
      %c0_11 = arith.constant 0 : index
      %c0_12 = arith.constant 0 : index
      %13 = vector.load %arg7[%c0_11, %c0_12] : memref<128x128xf32, #tpu.memory_space<vmem>>, vector<128x128xf32>
      tpu.vector_store %arg7[%c0_11, %c0_12], %12 {strides = array<i32>} : memref<128x128xf32, #tpu.memory_space<vmem>>, vector<128x128xf32>,
    } else {
    }
    %c0 = arith.constant 0 : index
    %c0_1 = arith.constant 0 : index
    %3 = vector.load %arg7[%c0, %c0_1] : memref<128x128xf32, #tpu.memory_space<vmem>>, vector<128x128xf32>
    %c0_2 = arith.constant 0 : index
    %c0_3 = arith.constant 0 : index
    %4 = vector.load %arg3[%c0_2, %c0_3] : memref<128x128xbf16, #tpu.memory_space<vmem>>, vector<128x128xbf16>
    %c0_4 = arith.constant 0 : index
    %c0_5 = arith.constant 0 : index
    %5 = vector.load %arg4[%c0_4, %c0_5] : memref<128x128xbf16, #tpu.memory_space<vmem>>, vector<128x128xbf16>
    %cst = arith.constant dense<0.000000e+00> : vector<128x128xf32>
    %6 = tpu.matmul %4, %5, %cst {dimension_numbers = #tpu.dot_dimension_numbers<[1], [0], [0], [1], [0, 0, 1, 1], [], []>} : vector<128x128xbf16>, vector<128x128xbf16>, vector<128x128xf32> -> vector<128x128xf32>
    %7 = arith.addf %3, %6 : vector<128x128xf32>
    %c0_6 = arith.constant 0 : index
    %c0_7 = arith.constant 0 : index
    %8 = vector.load %arg7[%c0_6, %c0_7] : memref<128x128xf32, #tpu.memory_space<vmem>>, vector<128x128xf32>
    tpu.vector_store %arg7[%c0_6, %c0_7], %7 {strides = array<i32>} : memref<128x128xf32, #tpu.memory_space<vmem>>, vector<128x128xf32>,
    %c0_i32_8 = arith.constant 0 : i32
    %9 = arith.cmpi eq, %arg2, %c0_i32_8 : i32
    %10 = arith.extui %9 : i1 to i32
    %c0_i32_9 = arith.constant 0 : i32
    %11 = arith.cmpi ne, %10, %c0_i32_9 : i32
    scf.if %11 {
      %c0_10 = arith.constant 0 : index
      %c0_11 = arith.constant 0 : index
      %12 = vector.load %arg7[%c0_10, %c0_11] : memref<128x128xf32, #tpu.memory_space<vmem>>, vector<128x128xf32>
      %c0_12 = arith.constant 0 : index
      %c0_13 = arith.constant 0 : index
      %13 = vector.load %arg5[%c0_12, %c0_13] : memref<1x128xf32, #tpu.memory_space<vmem>>, vector<1x128xf32>
      %14 = vector.broadcast %13 : vector<1x128xf32> to vector<128x128xf32>
      %15 = arith.addf %12, %14 : vector<128x128xf32>
      %cst_14 = arith.constant 0.000000e+00 : f32
      %16 = vector.broadcast %cst_14 : f32 to vector<128x128xf32>
      %17 = arith.maximumf %15, %16 : vector<128x128xf32>
      %18 = arith.truncf %17 : vector<128x128xf32> to vector<128x128xbf16>
      %c0_15 = arith.constant 0 : index
      %c0_16 = arith.constant 0 : index
      %19 = vector.load %arg6[%c0_15, %c0_16] : memref<128x128xbf16, #tpu.memory_space<vmem>>, vector<128x128xbf16>
      tpu.vector_store %arg6[%c0_15, %c0_16], %18 {strides = array<i32>} : memref<128x128xbf16, #tpu.memory_space<vmem>>, vector<128x128xbf16>,
    } else {
    }
    return
  }
  func.func @transform_0(%arg0: i32, %arg1: i32, %arg2: i32) -> (i32, i32) {
    %c0_i32 = arith.constant 0 : i32
    return %arg0, %arg2 : i32, i32
  }
  func.func @transform_1(%arg0: i32, %arg1: i32, %arg2: i32) -> (i32, i32) {
    %c0_i32 = arith.constant 0 : i32
    return %arg2, %arg1 : i32, i32
  }
  func.func @transform_2(%arg0: i32, %arg1: i32, %arg2: i32) -> (i32, i32) {
    %c0_i32 = arith.constant 0 : i32
    %c0_i32_0 = arith.constant 0 : i32
    return %c0_i32, %arg1 : i32, i32
  }
  func.func @transform_3(%arg0: i32, %arg1: i32, %arg2: i32) -> (i32, i32) {
    %c0_i32 = arith.constant 0 : i32
    return %arg0, %arg1 : i32, i32
  }
}

module attributes {stable_mosaic.version = 11 : i64} {
  func.func @_matmul_bias_act_kernel(%arg0: i32, %arg1: i32, %arg2: i32, %arg3: memref<32x128xbf16, #tpu.memory_space<vmem>>, %arg4: memref<128x128xbf16, #tpu.memory_space<vmem>>, %arg5: memref<1x128xf32, #tpu.memory_space<vmem>>, %arg6: memref<32x128xbf16, #tpu.memory_space<vmem>>, %arg7: memref<32x128xf32, #tpu.memory_space<vmem>>) attributes {dimension_semantics = [#tpu.dimension_semantics<parallel>, #tpu.dimension_semantics<parallel>, #tpu.dimension_semantics<arbitrary>], iteration_bounds = array<i64: 1, 1, 1>, scalar_prefetch = 0 : i64, scratch_operands = 1 : i64, tpu.core_type = #tpu.core_type<tc>, window_params = [{transform_indices = @transform_0, window_bounds = array<i64: 32, 128>}, {transform_indices = @transform_1, window_bounds = array<i64: 128, 128>}, {transform_indices = @transform_2, window_bounds = array<i64: 1, 128>}, {transform_indices = @transform_3, window_bounds = array<i64: 32, 128>}]} {
    %c0_i32 = arith.constant 0 : i32
    %0 = arith.cmpi eq, %arg2, %c0_i32 : i32
    %1 = arith.extui %0 : i1 to i32
    %c0_i32_0 = arith.constant 0 : i32
    %2 = arith.cmpi ne, %1, %c0_i32_0 : i32
    scf.if %2 {
      %cst_10 = arith.constant 0.000000e+00 : f32
      %12 = vector.broadcast %cst_10 : f32 to vector<32x128xf32>
      %c0_11 = arith.constant 0 : index
      %c0_12 = arith.constant 0 : index
      %13 = vector.load %arg7[%c0_11, %c0_12] : memref<32x128xf32, #tpu.memory_space<vmem>>, vector<32x128xf32>
      tpu.vector_store %arg7[%c0_11, %c0_12], %12 {strides = array<i32>} : memref<32x128xf32, #tpu.memory_space<vmem>>, vector<32x128xf32>,
    } else {
    }
    %c0 = arith.constant 0 : index
    %c0_1 = arith.constant 0 : index
    %3 = vector.load %arg7[%c0, %c0_1] : memref<32x128xf32, #tpu.memory_space<vmem>>, vector<32x128xf32>
    %c0_2 = arith.constant 0 : index
    %c0_3 = arith.constant 0 : index
    %4 = vector.load %arg3[%c0_2, %c0_3] : memref<32x128xbf16, #tpu.memory_space<vmem>>, vector<32x128xbf16>
    %c0_4 = arith.constant 0 : index
    %c0_5 = arith.constant 0 : index
    %5 = vector.load %arg4[%c0_4, %c0_5] : memref<128x128xbf16, #tpu.memory_space<vmem>>, vector<128x128xbf16>
    %cst = arith.constant dense<0.000000e+00> : vector<32x128xf32>
    %6 = tpu.matmul %4, %5, %cst {dimension_numbers = #tpu.dot_dimension_numbers<[1], [0], [0], [1], [0, 0, 1, 1], [], []>} : vector<32x128xbf16>, vector<128x128xbf16>, vector<32x128xf32> -> vector<32x128xf32>
    %7 = arith.addf %3, %6 : vector<32x128xf32>
    %c0_6 = arith.constant 0 : index
    %c0_7 = arith.constant 0 : index
    %8 = vector.load %arg7[%c0_6, %c0_7] : memref<32x128xf32, #tpu.memory_space<vmem>>, vector<32x128xf32>
    tpu.vector_store %arg7[%c0_6, %c0_7], %7 {strides = array<i32>} : memref<32x128xf32, #tpu.memory_space<vmem>>, vector<32x128xf32>,
    %c0_i32_8 = arith.constant 0 : i32
    %9 = arith.cmpi eq, %arg2, %c0_i32_8 : i32
    %10 = arith.extui %9 : i1 to i32
    %c0_i32_9 = arith.constant 0 : i32
    %11 = arith.cmpi ne, %10, %c0_i32_9 : i32
    scf.if %11 {
      %c0_10 = arith.constant 0 : index
      %c0_11 = arith.constant 0 : index
      %12 = vector.load %arg7[%c0_10, %c0_11] : memref<32x128xf32, #tpu.memory_space<vmem>>, vector<32x128xf32>
      %c0_12 = arith.constant 0 : index
      %c0_13 = arith.constant 0 : index
      %13 = vector.load %arg5[%c0_12, %c0_13] : memref<1x128xf32, #tpu.memory_space<vmem>>, vector<1x128xf32>
      %14 = vector.broadcast %13 : vector<1x128xf32> to vector<32x128xf32>
      %15 = arith.addf %12, %14 : vector<32x128xf32>
      %cst_14 = arith.constant 0.000000e+00 : f32
      %16 = vector.broadcast %cst_14 : f32 to vector<32x128xf32>
      %17 = arith.maximumf %15, %16 : vector<32x128xf32>
      %18 = arith.truncf %17 : vector<32x128xf32> to vector<32x128xbf16>
      %c0_15 = arith.constant 0 : index
      %c0_16 = arith.constant 0 : index
      %19 = vector.load %arg6[%c0_15, %c0_16] : memref<32x128xbf16, #tpu.memory_space<vmem>>, vector<32x128xbf16>
      tpu.vector_store %arg6[%c0_15, %c0_16], %18 {strides = array<i32>} : memref<32x128xbf16, #tpu.memory_space<vmem>>, vector<32x128xbf16>,
    } else {
    }
    return
  }
  func.func @transform_0(%arg0: i32, %arg1: i32, %arg2: i32) -> (i32, i32) {
    %c0_i32 = arith.constant 0 : i32
    return %arg0, %arg2 : i32, i32
  }
  func.func @transform_1(%arg0: i32, %arg1: i32, %arg2: i32) -> (i32, i32) {
    %c0_i32 = arith.constant 0 : i32
    return %arg2, %arg1 : i32, i32
  }
  func.func @transform_2(%arg0: i32, %arg1: i32, %arg2: i32) -> (i32, i32) {
    %c0_i32 = arith.constant 0 : i32
    %c0_i32_0 = arith.constant 0 : i32
    return %c0_i32, %arg1 : i32, i32
  }
  func.func @transform_3(%arg0: i32, %arg1: i32, %arg2: i32) -> (i32, i32) {
    %c0_i32 = arith.constant 0 : i32
    return %arg0, %arg1 : i32, i32
  }
}

module attributes {stable_mosaic.version = 11 : i64} {
  func.func @_matmul_bias_act_kernel(%arg0: i32, %arg1: i32, %arg2: i32, %arg3: memref<32x256xbf16, #tpu.memory_space<vmem>>, %arg4: memref<256x128xbf16, #tpu.memory_space<vmem>>, %arg5: memref<1x128xf32, #tpu.memory_space<vmem>>, %arg6: memref<32x128xbf16, #tpu.memory_space<vmem>>, %arg7: memref<32x128xf32, #tpu.memory_space<vmem>>) attributes {dimension_semantics = [#tpu.dimension_semantics<parallel>, #tpu.dimension_semantics<parallel>, #tpu.dimension_semantics<arbitrary>], iteration_bounds = array<i64: 1, 1, 1>, scalar_prefetch = 0 : i64, scratch_operands = 1 : i64, tpu.core_type = #tpu.core_type<tc>, window_params = [{transform_indices = @transform_0, window_bounds = array<i64: 32, 256>}, {transform_indices = @transform_1, window_bounds = array<i64: 256, 128>}, {transform_indices = @transform_2, window_bounds = array<i64: 1, 128>}, {transform_indices = @transform_3, window_bounds = array<i64: 32, 128>}]} {
    %c0_i32 = arith.constant 0 : i32
    %0 = arith.cmpi eq, %arg2, %c0_i32 : i32
    %1 = arith.extui %0 : i1 to i32
    %c0_i32_0 = arith.constant 0 : i32
    %2 = arith.cmpi ne, %1, %c0_i32_0 : i32
    scf.if %2 {
      %cst_10 = arith.constant 0.000000e+00 : f32
      %12 = vector.broadcast %cst_10 : f32 to vector<32x128xf32>
      %c0_11 = arith.constant 0 : index
      %c0_12 = arith.constant 0 : index
      %13 = vector.load %arg7[%c0_11, %c0_12] : memref<32x128xf32, #tpu.memory_space<vmem>>, vector<32x128xf32>
      tpu.vector_store %arg7[%c0_11, %c0_12], %12 {strides = array<i32>} : memref<32x128xf32, #tpu.memory_space<vmem>>, vector<32x128xf32>,
    } else {
    }
    %c0 = arith.constant 0 : index
    %c0_1 = arith.constant 0 : index
    %3 = vector.load %arg7[%c0, %c0_1] : memref<32x128xf32, #tpu.memory_space<vmem>>, vector<32x128xf32>
    %c0_2 = arith.constant 0 : index
    %c0_3 = arith.constant 0 : index
    %4 = vector.load %arg3[%c0_2, %c0_3] : memref<32x256xbf16, #tpu.memory_space<vmem>>, vector<32x256xbf16>
    %c0_4 = arith.constant 0 : index
    %c0_5 = arith.constant 0 : index
    %5 = vector.load %arg4[%c0_4, %c0_5] : memref<256x128xbf16, #tpu.memory_space<vmem>>, vector<256x128xbf16>
    %cst = arith.constant dense<0.000000e+00> : vector<32x128xf32>
    %6 = tpu.matmul %4, %5, %cst {dimension_numbers = #tpu.dot_dimension_numbers<[1], [0], [0], [1], [0, 0, 1, 1], [], []>} : vector<32x256xbf16>, vector<256x128xbf16>, vector<32x128xf32> -> vector<32x128xf32>
    %7 = arith.addf %3, %6 : vector<32x128xf32>
    %c0_6 = arith.constant 0 : index
    %c0_7 = arith.constant 0 : index
    %8 = vector.load %arg7[%c0_6, %c0_7] : memref<32x128xf32, #tpu.memory_space<vmem>>, vector<32x128xf32>
    tpu.vector_store %arg7[%c0_6, %c0_7], %7 {strides = array<i32>} : memref<32x128xf32, #tpu.memory_space<vmem>>, vector<32x128xf32>,
    %c0_i32_8 = arith.constant 0 : i32
    %9 = arith.cmpi eq, %arg2, %c0_i32_8 : i32
    %10 = arith.extui %9 : i1 to i32
    %c0_i32_9 = arith.constant 0 : i32
    %11 = arith.cmpi ne, %10, %c0_i32_9 : i32
    scf.if %11 {
      %c0_10 = arith.constant 0 : index
      %c0_11 = arith.constant 0 : index
      %12 = vector.load %arg7[%c0_10, %c0_11] : memref<32x128xf32, #tpu.memory_space<vmem>>, vector<32x128xf32>
      %c0_12 = arith.constant 0 : index
      %c0_13 = arith.constant 0 : index
      %13 = vector.load %arg5[%c0_12, %c0_13] : memref<1x128xf32, #tpu.memory_space<vmem>>, vector<1x128xf32>
      %14 = vector.broadcast %13 : vector<1x128xf32> to vector<32x128xf32>
      %15 = arith.addf %12, %14 : vector<32x128xf32>
      %cst_14 = arith.constant 0.000000e+00 : f32
      %16 = vector.broadcast %cst_14 : f32 to vector<32x128xf32>
      %17 = arith.maximumf %15, %16 : vector<32x128xf32>
      %18 = arith.truncf %17 : vector<32x128xf32> to vector<32x128xbf16>
      %c0_15 = arith.constant 0 : index
      %c0_16 = arith.constant 0 : index
      %19 = vector.load %arg6[%c0_15, %c0_16] : memref<32x128xbf16, #tpu.memory_space<vmem>>, vector<32x128xbf16>
      tpu.vector_store %arg6[%c0_15, %c0_16], %18 {strides = array<i32>} : memref<32x128xbf16, #tpu.memory_space<vmem>>, vector<32x128xbf16>,
    } else {
    }
    return
  }
  func.func @transform_0(%arg0: i32, %arg1: i32, %arg2: i32) -> (i32, i32) {
    %c0_i32 = arith.constant 0 : i32
    return %arg0, %arg2 : i32, i32
  }
  func.func @transform_1(%arg0: i32, %arg1: i32, %arg2: i32) -> (i32, i32) {
    %c0_i32 = arith.constant 0 : i32
    return %arg2, %arg1 : i32, i32
  }
  func.func @transform_2(%arg0: i32, %arg1: i32, %arg2: i32) -> (i32, i32) {
    %c0_i32 = arith.constant 0 : i32
    %c0_i32_0 = arith.constant 0 : i32
    return %c0_i32, %arg1 : i32, i32
  }
  func.func @transform_3(%arg0: i32, %arg1: i32, %arg2: i32) -> (i32, i32) {
    %c0_i32 = arith.constant 0 : i32
    return %arg0, %arg1 : i32, i32
  }
}

module attributes {stable_mosaic.version = 11 : i64} {
  func.func @_matmul_bias_act_kernel(%arg0: i32, %arg1: i32, %arg2: i32, %arg3: memref<32x128xbf16, #tpu.memory_space<vmem>>, %arg4: memref<128x128xbf16, #tpu.memory_space<vmem>>, %arg5: memref<1x128xf32, #tpu.memory_space<vmem>>, %arg6: memref<32x128xbf16, #tpu.memory_space<vmem>>, %arg7: memref<32x128xf32, #tpu.memory_space<vmem>>) attributes {dimension_semantics = [#tpu.dimension_semantics<parallel>, #tpu.dimension_semantics<parallel>, #tpu.dimension_semantics<arbitrary>], iteration_bounds = array<i64: 1, 1, 1>, scalar_prefetch = 0 : i64, scratch_operands = 1 : i64, tpu.core_type = #tpu.core_type<tc>, window_params = [{transform_indices = @transform_0, window_bounds = array<i64: 32, 128>}, {transform_indices = @transform_1, window_bounds = array<i64: 128, 128>}, {transform_indices = @transform_2, window_bounds = array<i64: 1, 128>}, {transform_indices = @transform_3, window_bounds = array<i64: 32, 128>}]} {
    %c0_i32 = arith.constant 0 : i32
    %0 = arith.cmpi eq, %arg2, %c0_i32 : i32
    %1 = arith.extui %0 : i1 to i32
    %c0_i32_0 = arith.constant 0 : i32
    %2 = arith.cmpi ne, %1, %c0_i32_0 : i32
    scf.if %2 {
      %cst_10 = arith.constant 0.000000e+00 : f32
      %12 = vector.broadcast %cst_10 : f32 to vector<32x128xf32>
      %c0_11 = arith.constant 0 : index
      %c0_12 = arith.constant 0 : index
      %13 = vector.load %arg7[%c0_11, %c0_12] : memref<32x128xf32, #tpu.memory_space<vmem>>, vector<32x128xf32>
      tpu.vector_store %arg7[%c0_11, %c0_12], %12 {strides = array<i32>} : memref<32x128xf32, #tpu.memory_space<vmem>>, vector<32x128xf32>,
    } else {
    }
    %c0 = arith.constant 0 : index
    %c0_1 = arith.constant 0 : index
    %3 = vector.load %arg7[%c0, %c0_1] : memref<32x128xf32, #tpu.memory_space<vmem>>, vector<32x128xf32>
    %c0_2 = arith.constant 0 : index
    %c0_3 = arith.constant 0 : index
    %4 = vector.load %arg3[%c0_2, %c0_3] : memref<32x128xbf16, #tpu.memory_space<vmem>>, vector<32x128xbf16>
    %c0_4 = arith.constant 0 : index
    %c0_5 = arith.constant 0 : index
    %5 = vector.load %arg4[%c0_4, %c0_5] : memref<128x128xbf16, #tpu.memory_space<vmem>>, vector<128x128xbf16>
    %cst = arith.constant dense<0.000000e+00> : vector<32x128xf32>
    %6 = tpu.matmul %4, %5, %cst {dimension_numbers = #tpu.dot_dimension_numbers<[1], [0], [0], [1], [0, 0, 1, 1], [], []>} : vector<32x128xbf16>, vector<128x128xbf16>, vector<32x128xf32> -> vector<32x128xf32>
    %7 = arith.addf %3, %6 : vector<32x128xf32>
    %c0_6 = arith.constant 0 : index
    %c0_7 = arith.constant 0 : index
    %8 = vector.load %arg7[%c0_6, %c0_7] : memref<32x128xf32, #tpu.memory_space<vmem>>, vector<32x128xf32>
    tpu.vector_store %arg7[%c0_6, %c0_7], %7 {strides = array<i32>} : memref<32x128xf32, #tpu.memory_space<vmem>>, vector<32x128xf32>,
    %c0_i32_8 = arith.constant 0 : i32
    %9 = arith.cmpi eq, %arg2, %c0_i32_8 : i32
    %10 = arith.extui %9 : i1 to i32
    %c0_i32_9 = arith.constant 0 : i32
    %11 = arith.cmpi ne, %10, %c0_i32_9 : i32
    scf.if %11 {
      %c0_10 = arith.constant 0 : index
      %c0_11 = arith.constant 0 : index
      %12 = vector.load %arg7[%c0_10, %c0_11] : memref<32x128xf32, #tpu.memory_space<vmem>>, vector<32x128xf32>
      %c0_12 = arith.constant 0 : index
      %c0_13 = arith.constant 0 : index
      %13 = vector.load %arg5[%c0_12, %c0_13] : memref<1x128xf32, #tpu.memory_space<vmem>>, vector<1x128xf32>
      %14 = vector.broadcast %13 : vector<1x128xf32> to vector<32x128xf32>
      %15 = arith.addf %12, %14 : vector<32x128xf32>
      %16 = arith.truncf %15 : vector<32x128xf32> to vector<32x128xbf16>
      %c0_14 = arith.constant 0 : index
      %c0_15 = arith.constant 0 : index
      %17 = vector.load %arg6[%c0_14, %c0_15] : memref<32x128xbf16, #tpu.memory_space<vmem>>, vector<32x128xbf16>
      tpu.vector_store %arg6[%c0_14, %c0_15], %16 {strides = array<i32>} : memref<32x128xbf16, #tpu.memory_space<vmem>>, vector<32x128xbf16>,
    } else {
    }
    return
  }
  func.func @transform_0(%arg0: i32, %arg1: i32, %arg2: i32) -> (i32, i32) {
    %c0_i32 = arith.constant 0 : i32
    return %arg0, %arg2 : i32, i32
  }
  func.func @transform_1(%arg0: i32, %arg1: i32, %arg2: i32) -> (i32, i32) {
    %c0_i32 = arith.constant 0 : i32
    return %arg2, %arg1 : i32, i32
  }
  func.func @transform_2(%arg0: i32, %arg1: i32, %arg2: i32) -> (i32, i32) {
    %c0_i32 = arith.constant 0 : i32
    %c0_i32_0 = arith.constant 0 : i32
    return %c0_i32, %arg1 : i32, i32
  }
  func.func @transform_3(%arg0: i32, %arg1: i32, %arg2: i32) -> (i32, i32) {
    %c0_i32 = arith.constant 0 : i32
    return %arg0, %arg1 : i32, i32
  }
}

module attributes {stable_mosaic.version = 11 : i64} {
  func.func @_matmul_bias_act_kernel(%arg0: i32, %arg1: i32, %arg2: i32, %arg3: memref<8x128xbf16, #tpu.memory_space<vmem>>, %arg4: memref<128x256xbf16, #tpu.memory_space<vmem>>, %arg5: memref<8x256xf32, #tpu.memory_space<vmem>>, %arg6: memref<8x256xf32, #tpu.memory_space<vmem>>) attributes {dimension_semantics = [#tpu.dimension_semantics<parallel>, #tpu.dimension_semantics<parallel>, #tpu.dimension_semantics<arbitrary>], iteration_bounds = array<i64: 1, 1, 1>, scalar_prefetch = 0 : i64, scratch_operands = 1 : i64, tpu.core_type = #tpu.core_type<tc>, window_params = [{transform_indices = @transform_0, window_bounds = array<i64: 8, 128>}, {transform_indices = @transform_1, window_bounds = array<i64: 128, 256>}, {transform_indices = @transform_2, window_bounds = array<i64: 8, 256>}]} {
    %c0_i32 = arith.constant 0 : i32
    %0 = arith.cmpi eq, %arg2, %c0_i32 : i32
    %1 = arith.extui %0 : i1 to i32
    %c0_i32_0 = arith.constant 0 : i32
    %2 = arith.cmpi ne, %1, %c0_i32_0 : i32
    scf.if %2 {
      %cst_10 = arith.constant 0.000000e+00 : f32
      %12 = vector.broadcast %cst_10 : f32 to vector<8x256xf32>
      %c0_11 = arith.constant 0 : index
      %c0_12 = arith.constant 0 : index
      %13 = vector.load %arg6[%c0_11, %c0_12] : memref<8x256xf32, #tpu.memory_space<vmem>>, vector<8x256xf32>
      tpu.vector_store %arg6[%c0_11, %c0_12], %12 {strides = array<i32>} : memref<8x256xf32, #tpu.memory_space<vmem>>, vector<8x256xf32>,
    } else {
    }
    %c0 = arith.constant 0 : index
    %c0_1 = arith.constant 0 : index
    %3 = vector.load %arg6[%c0, %c0_1] : memref<8x256xf32, #tpu.memory_space<vmem>>, vector<8x256xf32>
    %c0_2 = arith.constant 0 : index
    %c0_3 = arith.constant 0 : index
    %4 = vector.load %arg3[%c0_2, %c0_3] : memref<8x128xbf16, #tpu.memory_space<vmem>>, vector<8x128xbf16>
    %c0_4 = arith.constant 0 : index
    %c0_5 = arith.constant 0 : index
    %5 = vector.load %arg4[%c0_4, %c0_5] : memref<128x256xbf16, #tpu.memory_space<vmem>>, vector<128x256xbf16>
    %cst = arith.constant dense<0.000000e+00> : vector<8x256xf32>
    %6 = tpu.matmul %4, %5, %cst {dimension_numbers = #tpu.dot_dimension_numbers<[1], [0], [0], [1], [0, 0, 1, 1], [], []>} : vector<8x128xbf16>, vector<128x256xbf16>, vector<8x256xf32> -> vector<8x256xf32>
    %7 = arith.addf %3, %6 : vector<8x256xf32>
    %c0_6 = arith.constant 0 : index
    %c0_7 = arith.constant 0 : index
    %8 = vector.load %arg6[%c0_6, %c0_7] : memref<8x256xf32, #tpu.memory_space<vmem>>, vector<8x256xf32>
    tpu.vector_store %arg6[%c0_6, %c0_7], %7 {strides = array<i32>} : memref<8x256xf32, #tpu.memory_space<vmem>>, vector<8x256xf32>,
    %c0_i32_8 = arith.constant 0 : i32
    %9 = arith.cmpi eq, %arg2, %c0_i32_8 : i32
    %10 = arith.extui %9 : i1 to i32
    %c0_i32_9 = arith.constant 0 : i32
    %11 = arith.cmpi ne, %10, %c0_i32_9 : i32
    scf.if %11 {
      %c0_10 = arith.constant 0 : index
      %c0_11 = arith.constant 0 : index
      %12 = vector.load %arg6[%c0_10, %c0_11] : memref<8x256xf32, #tpu.memory_space<vmem>>, vector<8x256xf32>
      %c0_12 = arith.constant 0 : index
      %c0_13 = arith.constant 0 : index
      %13 = vector.load %arg5[%c0_12, %c0_13] : memref<8x256xf32, #tpu.memory_space<vmem>>, vector<8x256xf32>
      tpu.vector_store %arg5[%c0_12, %c0_13], %12 {strides = array<i32>} : memref<8x256xf32, #tpu.memory_space<vmem>>, vector<8x256xf32>,
    } else {
    }
    return
  }
  func.func @transform_0(%arg0: i32, %arg1: i32, %arg2: i32) -> (i32, i32) {
    %c0_i32 = arith.constant 0 : i32
    return %arg0, %arg2 : i32, i32
  }
  func.func @transform_1(%arg0: i32, %arg1: i32, %arg2: i32) -> (i32, i32) {
    %c0_i32 = arith.constant 0 : i32
    return %arg2, %arg1 : i32, i32
  }
  func.func @transform_2(%arg0: i32, %arg1: i32, %arg2: i32) -> (i32, i32) {
    %c0_i32 = arith.constant 0 : i32
    return %arg0, %arg1 : i32, i32
  }
}

</mosaic_0001>

<llo_original>
// kernel: deeplabv3plus_forward.5
$region0: #{deeplabv3plus_forward.5}
  #allocation0 [shape = 'u32[]', space=smem, size = 0x4, offset = 0x4, fixed_abs, tag = 'smem constant byte address 0x4 - core index']
  #allocation1 [shape = 'u32[144,128]{1,0:T(1,128)}', space=vmem, size = 0x12000, scoped, tag = 'internal scratch']
  #allocation2 [shape = 'f32[128,128]{1,0:T(8,128)}', space=vmem, size = 0x10000, scoped, tag = 'scratch operand']
  %s0 = inlined_call_operand.vmem [shape: bf16[128,128], index: 0, kind: input, shape index: {}]
  %s1 = inlined_call_operand.vmem [shape: bf16[128,128], index: 1, kind: input, shape index: {}]
  %s2 = inlined_call_operand.vmem [shape: f32[1,128], index: 2, kind: input, shape index: {}]
  %s3 = inlined_call_operand.vmem [shape: bf16[128,128], index: 3, kind: output, shape index: {}]
  %s4 = sld [smem:[#allocation0]]
  $region30: #{deeplabv3plus_forward.5} parent=0
    _
  %s6 = ssub.s32 1, %s4
  %s7 = scalar_select 0, %s6, %s4
  // Predicated region
  $region2: #{deeplabv3plus_forward.5} parent=0 // pred_check
    _
  $region3: #{deeplabv3plus_forward.5} parent=0 // pred_check_branch
    %9 = sbr.rel (0) target = $region5
  $region4: #{deeplabv3plus_forward.5} parent=0 // pred_region
    _
  $region5: #{deeplabv3plus_forward.5} parent=0 // pred_fallthru
    _
  // Predicated region
  $region6: #{deeplabv3plus_forward.5} parent=0 // pred_check
    _
  $region7: #{deeplabv3plus_forward.5} parent=0 // pred_check_branch
    %11 = sbr.rel (0) target = $region9
  $region8: #{deeplabv3plus_forward.5} parent=0 // pred_region
    _
  $region9: #{deeplabv3plus_forward.5} parent=0 // pred_fallthru
    _
  // Predicated region
  $region10: #{deeplabv3plus_forward.5} parent=0 // pred_check
    _
  $region11: #{deeplabv3plus_forward.5} parent=0 // pred_check_branch
    %13 = sbr.rel (0) target = $region13
  $region12: #{deeplabv3plus_forward.5} parent=0 // pred_region
    _
  $region13: #{deeplabv3plus_forward.5} parent=0 // pred_fallthru
    _
  %p15 = scmp.eq.s32.totalorder 0, 0
  // Predicated region
  $region14: #{deeplabv3plus_forward.5} parent=0 // pred_check
    %p16 = pneg %p15
  $region15: #{deeplabv3plus_forward.5} parent=0 // pred_check_branch
    %18 = sbr.rel (%p16) target = $region17
  $region16: #{deeplabv3plus_forward.5} parent=0 // pred_region
    %19 = vst [vmem:[#allocation2] sm:$0xff] 0.0
    %20 = vst [vmem:[#allocation2 + $0x8] sm:$0xff] 0.0
    %21 = vst [vmem:[#allocation2 + $0x10] sm:$0xff] 0.0
    %22 = vst [vmem:[#allocation2 + $0x18] sm:$0xff] 0.0
    %23 = vst [vmem:[#allocation2 + $0x20] sm:$0xff] 0.0
    %24 = vst [vmem:[#allocation2 + $0x28] sm:$0xff] 0.0
    %25 = vst [vmem:[#allocation2 + $0x30] sm:$0xff] 0.0
    %26 = vst [vmem:[#allocation2 + $0x38] sm:$0xff] 0.0
    %27 = vst [vmem:[#allocation2 + $0x40] sm:$0xff] 0.0
    %28 = vst [vmem:[#allocation2 + $0x48] sm:$0xff] 0.0
    %29 = vst [vmem:[#allocation2 + $0x50] sm:$0xff] 0.0
    %30 = vst [vmem:[#allocation2 + $0x58] sm:$0xff] 0.0
    %31 = vst [vmem:[#allocation2 + $0x60] sm:$0xff] 0.0
    %32 = vst [vmem:[#allocation2 + $0x68] sm:$0xff] 0.0
    %33 = vst [vmem:[#allocation2 + $0x70] sm:$0xff] 0.0
    %34 = vst [vmem:[#allocation2 + $0x78] sm:$0xff] 0.0
  $region17: #{deeplabv3plus_forward.5} parent=0 // pred_fallthru
    _
  %v35 = vld [vmem:[#allocation2] sm:$0xff]
  %v36 = vld [vmem:[#allocation2 + $0x8] sm:$0xff]
  %v37 = vld [vmem:[#allocation2 + $0x10] sm:$0xff]
  %v38 = vld [vmem:[#allocation2 + $0x18] sm:$0xff]
  %v39 = vld [vmem:[#allocation2 + $0x20] sm:$0xff]
  %v40 = vld [vmem:[#allocation2 + $0x28] sm:$0xff]
  %v41 = vld [vmem:[#allocation2 + $0x30] sm:$0xff]
  %v42 = vld [vmem:[#allocation2 + $0x38] sm:$0xff]
  %v43 = vld [vmem:[#allocation2 + $0x40] sm:$0xff]
  %v44 = vld [vmem:[#allocation2 + $0x48] sm:$0xff]
  %v45 = vld [vmem:[#allocation2 + $0x50] sm:$0xff]
  %v46 = vld [vmem:[#allocation2 + $0x58] sm:$0xff]
  %v47 = vld [vmem:[#allocation2 + $0x60] sm:$0xff]
  %v48 = vld [vmem:[#allocation2 + $0x68] sm:$0xff]
  %v49 = vld [vmem:[#allocation2 + $0x70] sm:$0xff]
  %v50 = vld [vmem:[#allocation2 + $0x78] sm:$0xff]
  %v51 = vld [vmem:[%s0] sm:$0xf]
  %v52 = vld [vmem:[%s0 + $0x4] sm:$0xf]
  %v53 = vld [vmem:[%s0 + $0x8] sm:$0xf]
  %v54 = vld [vmem:[%s0 + $0xc] sm:$0xf]
  %v55 = vld [vmem:[%s0 + $0x10] sm:$0xf]
  %v56 = vld [vmem:[%s0 + $0x14] sm:$0xf]
  %v57 = vld [vmem:[%s0 + $0x18] sm:$0xf]
  %v58 = vld [vmem:[%s0 + $0x1c] sm:$0xf]
  %v59 = vld [vmem:[%s0 + $0x20] sm:$0xf]
  %v60 = vld [vmem:[%s0 + $0x24] sm:$0xf]
  %v61 = vld [vmem:[%s0 + $0x28] sm:$0xf]
  %v62 = vld [vmem:[%s0 + $0x2c] sm:$0xf]
  %v63 = vld [vmem:[%s0 + $0x30] sm:$0xf]
  %v64 = vld [vmem:[%s0 + $0x34] sm:$0xf]
  %v65 = vld [vmem:[%s0 + $0x38] sm:$0xf]
  %v66 = vld [vmem:[%s0 + $0x3c] sm:$0xf]
  %v67 = vld [vmem:[%s1] sm:$0xf]
  %v68 = vld [vmem:[%s1 + $0x4] sm:$0xf]
  %v69 = vld [vmem:[%s1 + $0x8] sm:$0xf]
  %v70 = vld [vmem:[%s1 + $0xc] sm:$0xf]
  %v71 = vld [vmem:[%s1 + $0x10] sm:$0xf]
  %v72 = vld [vmem:[%s1 + $0x14] sm:$0xf]
  %v73 = vld [vmem:[%s1 + $0x18] sm:$0xf]
  %v74 = vld [vmem:[%s1 + $0x1c] sm:$0xf]
  %v75 = vld [vmem:[%s1 + $0x20] sm:$0xf]
  %v76 = vld [vmem:[%s1 + $0x24] sm:$0xf]
  %v77 = vld [vmem:[%s1 + $0x28] sm:$0xf]
  %v78 = vld [vmem:[%s1 + $0x2c] sm:$0xf]
  %v79 = vld [vmem:[%s1 + $0x30] sm:$0xf]
  %v80 = vld [vmem:[%s1 + $0x34] sm:$0xf]
  %v81 = vld [vmem:[%s1 + $0x38] sm:$0xf]
  %v82 = vld [vmem:[%s1 + $0x3c] sm:$0xf]
  %v99 = vunpack.c.l.b16 %v51
  %v100 = vunpack.c.l.b16 %v52
  %v101 = vunpack.c.l.b16 %v53
  %v102 = vunpack.c.l.b16 %v54
  %v103 = vunpack.c.l.b16 %v55
  %v104 = vunpack.c.l.b16 %v56
  %v105 = vunpack.c.l.b16 %v57
  %v106 = vunpack.c.l.b16 %v58
  %v107 = vunpack.c.l.b16 %v59
  %v108 = vunpack.c.l.b16 %v60
  %v109 = vunpack.c.l.b16 %v61
  %v110 = vunpack.c.l.b16 %v62
  %v111 = vunpack.c.l.b16 %v63
  %v112 = vunpack.c.l.b16 %v64
  %v113 = vunpack.c.l.b16 %v65
  %v114 = vunpack.c.l.b16 %v66
  %v115 = vpack.c.b16 %v100, %v99
  %v116 = vpack.c.b16 %v102, %v101
  %v117 = vpack.c.b16 %v104, %v103
  %v118 = vpack.c.b16 %v106, %v105
  %v119 = vpack.c.b16 %v108, %v107
  %v120 = vpack.c.b16 %v110, %v109
  %v121 = vpack.c.b16 %v112, %v111
  %v122 = vpack.c.b16 %v114, %v113
  %v147 = vunpack.c.l.b16 %v67
  %v148 = vunpack.c.l.b16 %v68
  %v149 = vunpack.c.l.b16 %v69
  %v150 = vunpack.c.l.b16 %v70
  %v151 = vunpack.c.l.b16 %v71
  %v152 = vunpack.c.l.b16 %v72
  %v153 = vunpack.c.l.b16 %v73
  %v154 = vunpack.c.l.b16 %v74
  %v155 = vunpack.c.l.b16 %v75
  %v156 = vunpack.c.l.b16 %v76
  %v157 = vunpack.c.l.b16 %v77
  %v158 = vunpack.c.l.b16 %v78
  %v159 = vunpack.c.l.b16 %v79
  %v160 = vunpack.c.l.b16 %v80
  %v161 = vunpack.c.l.b16 %v81
  %v162 = vunpack.c.l.b16 %v82
  %v163 = vpack.c.b16 %v148, %v147
  %v164 = vpack.c.b16 %v150, %v149
  %v165 = vpack.c.b16 %v152, %v151
  %v166 = vpack.c.b16 %v154, %v153
  %v167 = vpack.c.b16 %v156, %v155
  %v168 = vpack.c.b16 %v158, %v157
  %v169 = vpack.c.b16 %v160, %v159
  %v170 = vpack.c.b16 %v162, %v161
  %179 = vmatprep.subr.bf16.mxu0 0
  %180 = vmatpush1.bf16.msra.mxu0 %v163
  %181 = vmatprep.subr.bf16.mxu0 0
  %182 = vmatpush1.bf16.msra.mxu0 %v164
  %183 = vmatprep.subr.bf16.mxu0 0
  %184 = vmatpush1.bf16.msra.mxu0 %v165
  %185 = vmatprep.subr.bf16.mxu0 0
  %186 = vmatpush1.bf16.msra.mxu0 %v166
  %187 = vmatprep.subr.bf16.mxu0 0
  %188 = vmatpush1.bf16.msra.mxu0 %v167
  %189 = vmatprep.subr.bf16.mxu0 0
  %190 = vmatpush1.bf16.msra.mxu0 %v168
  %191 = vmatprep.subr.bf16.mxu0 0
  %192 = vmatpush1.bf16.msra.mxu0 %v169
  %193 = vmatprep.subr.bf16.mxu0 0
  %194 = vmatpush1.bf16.msra.mxu0 %v170
  %195 = vmatprep.subr.bf16.mxu0 0
  %196 = vmatpush1.bf16.msra.mxu0 0
  %197 = vmatprep.subr.bf16.mxu0 0
  %198 = vmatpush1.bf16.msra.mxu0 0
  %199 = vmatprep.subr.bf16.mxu0 0
  %200 = vmatpush1.bf16.msra.mxu0 0
  %201 = vmatprep.subr.bf16.mxu0 0
  %202 = vmatpush1.bf16.msra.mxu0 0
  %203 = vmatprep.subr.bf16.mxu0 0
  %204 = vmatpush1.bf16.msra.mxu0 0
  %205 = vmatprep.subr.bf16.mxu0 0
  %206 = vmatpush1.bf16.msra.mxu0 0
  %207 = vmatprep.subr.bf16.mxu0 0
  %208 = vmatpush1.bf16.msra.mxu0 0
  %209 = vmatprep.subr.bf16.mxu0 0
  %210 = vmatpush1.bf16.msra.mxu0 0
  %211 = vmatprep.mubr.bf16.mxu0 0
  %212 = vmatmul.mubr.bf16.gmra.mrb[0].mxu0 %v115
  %v213 = vpop.f32.mrb[0].mxu0
  %v214 = vadd.f32 0.0, %v213
  %v215 = vpop.f32.mrb[0].mxu0
  %v216 = vpop.f32.mrb[0].mxu0
  %v217 = vadd.f32 0.0, %v216
  %v218 = vpop.f32.mrb[0].mxu0
  %219 = vmatprep.mubr.bf16.mxu0 0
  %220 = vmatmul.mubr.bf16.gmra.mrb[0].mxu0 %v116
  %v221 = vpop.f32.mrb[0].mxu0
  %v222 = vadd.f32 0.0, %v221
  %v223 = vpop.f32.mrb[0].mxu0
  %v224 = vpop.f32.mrb[0].mxu0
  %v225 = vadd.f32 0.0, %v224
  %v226 = vpop.f32.mrb[0].mxu0
  %227 = vmatprep.mubr.bf16.mxu0 0
  %228 = vmatmul.mubr.bf16.gmra.mrb[0].mxu0 %v117
  %v229 = vpop.f32.mrb[0].mxu0
  %v230 = vadd.f32 0.0, %v229
  %v231 = vpop.f32.mrb[0].mxu0
  %v232 = vpop.f32.mrb[0].mxu0
  %v233 = vadd.f32 0.0, %v232
  %v234 = vpop.f32.mrb[0].mxu0
  %235 = vmatprep.mubr.bf16.mxu0 0
  %236 = vmatmul.mubr.bf16.gmra.mrb[0].mxu0 %v118
  %v237 = vpop.f32.mrb[0].mxu0
  %v238 = vadd.f32 0.0, %v237
  %v239 = vpop.f32.mrb[0].mxu0
  %v240 = vpop.f32.mrb[0].mxu0
  %v241 = vadd.f32 0.0, %v240
  %v242 = vpop.f32.mrb[0].mxu0
  %243 = vmatprep.mubr.bf16.mxu0 0
  %244 = vmatmul.mubr.bf16.gmra.mrb[0].mxu0 %v119
  %v245 = vpop.f32.mrb[0].mxu0
  %v246 = vadd.f32 0.0, %v245
  %v247 = vpop.f32.mrb[0].mxu0
  %v248 = vpop.f32.mrb[0].mxu0
  %v249 = vadd.f32 0.0, %v248
  %v250 = vpop.f32.mrb[0].mxu0
  %251 = vmatprep.mubr.bf16.mxu0 0
  %252 = vmatmul.mubr.bf16.gmra.mrb[0].mxu0 %v120
  %v253 = vpop.f32.mrb[0].mxu0
  %v254 = vadd.f32 0.0, %v253
  %v255 = vpop.f32.mrb[0].mxu0
  %v256 = vpop.f32.mrb[0].mxu0
  %v257 = vadd.f32 0.0, %v256
  %v258 = vpop.f32.mrb[0].mxu0
  %259 = vmatprep.mubr.bf16.mxu0 0
  %260 = vmatmul.mubr.bf16.gmra.mrb[0].mxu0 %v121
  %v261 = vpop.f32.mrb[0].mxu0
  %v262 = vadd.f32 0.0, %v261
  %v263 = vpop.f32.mrb[0].mxu0
  %v264 = vpop.f32.mrb[0].mxu0
  %v265 = vadd.f32 0.0, %v264
  %v266 = vpop.f32.mrb[0].mxu0
  %267 = vmatprep.mubr.bf16.mxu0 0
  %268 = vmatmul.mubr.bf16.gmra.mrb[0].mxu0 %v122
  %v269 = vpop.f32.mrb[0].mxu0
  %v270 = vadd.f32 0.0, %v269
  %v271 = vpop.f32.mrb[0].mxu0
  %v272 = vpop.f32.mrb[0].mxu0
  %v273 = vadd.f32 0.0, %v272
  %v274 = vpop.f32.mrb[0].mxu0
  %275 = vdwg.mxu0
  %v276 = vadd.f32 %v35, %v214
  %v277 = vadd.f32 %v36, %v217
  %v278 = vadd.f32 %v37, %v222
  %v279 = vadd.f32 %v38, %v225
  %v280 = vadd.f32 %v39, %v230
  %v281 = vadd.f32 %v40, %v233
  %v282 = vadd.f32 %v41, %v238
  %v283 = vadd.f32 %v42, %v241
  %v284 = vadd.f32 %v43, %v246
  %v285 = vadd.f32 %v44, %v249
  %v286 = vadd.f32 %v45, %v254
  %v287 = vadd.f32 %v46, %v257
  %v288 = vadd.f32 %v47, %v262
  %v289 = vadd.f32 %v48, %v265
  %v290 = vadd.f32 %v49, %v270
  %v291 = vadd.f32 %v50, %v273
  %292 = vst [vmem:[#allocation2] sm:$0xff] %v276
  %293 = vst [vmem:[#allocation2 + $0x8] sm:$0xff] %v277
  %294 = vst [vmem:[#allocation2 + $0x10] sm:$0xff] %v278
  %295 = vst [vmem:[#allocation2 + $0x18] sm:$0xff] %v279
  %296 = vst [vmem:[#allocation2 + $0x20] sm:$0xff] %v280
  %297 = vst [vmem:[#allocation2 + $0x28] sm:$0xff] %v281
  %298 = vst [vmem:[#allocation2 + $0x30] sm:$0xff] %v282
  %299 = vst [vmem:[#allocation2 + $0x38] sm:$0xff] %v283
  %300 = vst [vmem:[#allocation2 + $0x40] sm:$0xff] %v284
  %301 = vst [vmem:[#allocation2 + $0x48] sm:$0xff] %v285
  %302 = vst [vmem:[#allocation2 + $0x50] sm:$0xff] %v286
  %303 = vst [vmem:[#allocation2 + $0x58] sm:$0xff] %v287
  %304 = vst [vmem:[#allocation2 + $0x60] sm:$0xff] %v288
  %305 = vst [vmem:[#allocation2 + $0x68] sm:$0xff] %v289
  %306 = vst [vmem:[#allocation2 + $0x70] sm:$0xff] %v290
  %307 = vst [vmem:[#allocation2 + $0x78] sm:$0xff] %v291
  // Predicated region
  $region18: #{deeplabv3plus_forward.5} parent=0 // pred_check
    %p308 = pneg %p15
  $region19: #{deeplabv3plus_forward.5} parent=0 // pred_check_branch
    %310 = sbr.rel (%p308) target = $region21
  $region20: #{deeplabv3plus_forward.5} parent=0 // pred_region
    %v311 = vld [vmem:[#allocation2] sm:$0xff]
    %v312 = vld [vmem:[#allocation2 + $0x8] sm:$0xff]
    %v313 = vld [vmem:[#allocation2 + $0x10] sm:$0xff]
    %v314 = vld [vmem:[#allocation2 + $0x18] sm:$0xff]
    %v315 = vld [vmem:[#allocation2 + $0x20] sm:$0xff]
    %v316 = vld [vmem:[#allocation2 + $0x28] sm:$0xff]
    %v317 = vld [vmem:[#allocation2 + $0x30] sm:$0xff]
    %v318 = vld [vmem:[#allocation2 + $0x38] sm:$0xff]
    %v319 = vld [vmem:[#allocation2 + $0x40] sm:$0xff]
    %v320 = vld [vmem:[#allocation2 + $0x48] sm:$0xff]
    %v321 = vld [vmem:[#allocation2 + $0x50] sm:$0xff]
    %v322 = vld [vmem:[#allocation2 + $0x58] sm:$0xff]
    %v323 = vld [vmem:[#allocation2 + $0x60] sm:$0xff]
    %v324 = vld [vmem:[#allocation2 + $0x68] sm:$0xff]
    %v325 = vld [vmem:[#allocation2 + $0x70] sm:$0xff]
    %v326 = vld [vmem:[#allocation2 + $0x78] sm:$0xff]
    %v327 = vld [vmem:[%s2] sm:$0x1]
    %v329 = vlaneseq
    %v330 = vshrl.u32 %v329, 7
    %v331 = vsub.s32 0, %v330
    %v332 = vrot.slane %v327, %v331
    %v334 = vadd.f32 %v311, %v332
    %v335 = vadd.f32 %v312, %v332
    %v336 = vadd.f32 %v313, %v332
    %v337 = vadd.f32 %v314, %v332
    %v338 = vadd.f32 %v315, %v332
    %v339 = vadd.f32 %v316, %v332
    %v340 = vadd.f32 %v317, %v332
    %v341 = vadd.f32 %v318, %v332
    %v342 = vadd.f32 %v319, %v332
    %v343 = vadd.f32 %v320, %v332
    %v344 = vadd.f32 %v321, %v332
    %v345 = vadd.f32 %v322, %v332
    %v346 = vadd.f32 %v323, %v332
    %v347 = vadd.f32 %v324, %v332
    %v348 = vadd.f32 %v325, %v332
    %v349 = vadd.f32 %v326, %v332
    %v350 = vmax.f32 %v334, 0.0
    %v351 = vmax.f32 %v335, 0.0
    %v352 = vmax.f32 %v336, 0.0
    %v353 = vmax.f32 %v337, 0.0
    %v354 = vmax.f32 %v338, 0.0
    %v355 = vmax.f32 %v339, 0.0
    %v356 = vmax.f32 %v340, 0.0
    %v357 = vmax.f32 %v341, 0.0
    %v358 = vmax.f32 %v342, 0.0
    %v359 = vmax.f32 %v343, 0.0
    %v360 = vmax.f32 %v344, 0.0
    %v361 = vmax.f32 %v345, 0.0
    %v362 = vmax.f32 %v346, 0.0
    %v363 = vmax.f32 %v347, 0.0
    %v364 = vmax.f32 %v348, 0.0
    %v365 = vmax.f32 %v349, 0.0
    %v366 = vpack.c.bf16 %v351, %v350
    %v367 = vpack.c.bf16 %v353, %v352
    %v368 = vpack.c.bf16 %v355, %v354
    %v369 = vpack.c.bf16 %v357, %v356
    %v370 = vpack.c.bf16 %v359, %v358
    %v371 = vpack.c.bf16 %v361, %v360
    %v372 = vpack.c.bf16 %v363, %v362
    %v373 = vpack.c.bf16 %v365, %v364
    %v382 = vunpack.c.l.b16 %v366
    %v383 = vunpack.c.h.b16 %v366
    %v384 = vunpack.c.l.b16 %v367
    %v385 = vunpack.c.h.b16 %v367
    %v386 = vunpack.c.l.b16 %v368
    %v387 = vunpack.c.h.b16 %v368
    %v388 = vunpack.c.l.b16 %v369
    %v389 = vunpack.c.h.b16 %v369
    %v390 = vunpack.c.l.b16 %v370
    %v391 = vunpack.c.h.b16 %v370
    %v392 = vunpack.c.l.b16 %v371
    %v393 = vunpack.c.h.b16 %v371
    %v394 = vunpack.c.l.b16 %v372
    %v395 = vunpack.c.h.b16 %v372
    %v396 = vunpack.c.l.b16 %v373
    %v397 = vunpack.c.h.b16 %v373
    %v398 = vpack.c.b16 %v382, %v382
    %v399 = vpack.c.b16 %v383, %v383
    %v400 = vpack.c.b16 %v384, %v384
    %v401 = vpack.c.b16 %v385, %v385
    %v402 = vpack.c.b16 %v386, %v386
    %v403 = vpack.c.b16 %v387, %v387
    %v404 = vpack.c.b16 %v388, %v388
    %v405 = vpack.c.b16 %v389, %v389
    %v406 = vpack.c.b16 %v390, %v390
    %v407 = vpack.c.b16 %v391, %v391
    %v408 = vpack.c.b16 %v392, %v392
    %v409 = vpack.c.b16 %v393, %v393
    %v410 = vpack.c.b16 %v394, %v394
    %v411 = vpack.c.b16 %v395, %v395
    %v412 = vpack.c.b16 %v396, %v396
    %v413 = vpack.c.b16 %v397, %v397
    %430 = vst [vmem:[%s3] sm:$0xf] %v398
    %431 = vst [vmem:[%s3 + $0x4] sm:$0xf] %v399
    %432 = vst [vmem:[%s3 + $0x8] sm:$0xf] %v400
    %433 = vst [vmem:[%s3 + $0xc] sm:$0xf] %v401
    %434 = vst [vmem:[%s3 + $0x10] sm:$0xf] %v402
    %435 = vst [vmem:[%s3 + $0x14] sm:$0xf] %v403
    %436 = vst [vmem:[%s3 + $0x18] sm:$0xf] %v404
    %437 = vst [vmem:[%s3 + $0x1c] sm:$0xf] %v405
    %438 = vst [vmem:[%s3 + $0x20] sm:$0xf] %v406
    %439 = vst [vmem:[%s3 + $0x24] sm:$0xf] %v407
    %440 = vst [vmem:[%s3 + $0x28] sm:$0xf] %v408
    %441 = vst [vmem:[%s3 + $0x2c] sm:$0xf] %v409
    %442 = vst [vmem:[%s3 + $0x30] sm:$0xf] %v410
    %443 = vst [vmem:[%s3 + $0x34] sm:$0xf] %v411
    %444 = vst [vmem:[%s3 + $0x38] sm:$0xf] %v412
    %445 = vst [vmem:[%s3 + $0x3c] sm:$0xf] %v413
  $region21: #{deeplabv3plus_forward.5} parent=0 // pred_fallthru
    _
  // Predicated region
  $region22: #{deeplabv3plus_forward.5} parent=0 // pred_check
    _
  $region23: #{deeplabv3plus_forward.5} parent=0 // pred_check_branch
    %447 = sbr.rel (0) target = $region25
  $region24: #{deeplabv3plus_forward.5} parent=0 // pred_region
    _
  $region25: #{deeplabv3plus_forward.5} parent=0 // pred_fallthru
    _
  // Predicated region
  $region26: #{deeplabv3plus_forward.5} parent=0 // pred_check
    _
  $region27: #{deeplabv3plus_forward.5} parent=0 // pred_check_branch
    %449 = sbr.rel (0) target = $region29
  $region28: #{deeplabv3plus_forward.5} parent=0 // pred_region
    _
  $region29: #{deeplabv3plus_forward.5} parent=0 // pred_fallthru
    _

// kernel: deeplabv3plus_forward.6
$region0: #{deeplabv3plus_forward.6}
  #allocation0 [shape = 'u32[]', space=smem, size = 0x4, offset = 0x4, fixed_abs, tag = 'smem constant byte address 0x4 - core index']
  #allocation1 [shape = 'u32[144,128]{1,0:T(1,128)}', space=vmem, size = 0x12000, scoped, tag = 'internal scratch']
  #allocation2 [shape = 'f32[32,128]{1,0:T(8,128)}', space=vmem, size = 0x4000, scoped, tag = 'scratch operand']
  %s0 = inlined_call_operand.vmem [shape: bf16[32,128], index: 0, kind: input, shape index: {}]
  %s1 = inlined_call_operand.vmem [shape: bf16[128,128], index: 1, kind: input, shape index: {}]
  %s2 = inlined_call_operand.vmem [shape: f32[1,128], index: 2, kind: input, shape index: {}]
  %s3 = inlined_call_operand.vmem [shape: bf16[32,128], index: 3, kind: output, shape index: {}]
  %s4 = sld [smem:[#allocation0]]
  $region30: #{deeplabv3plus_forward.6} parent=0
    _
  %s6 = ssub.s32 1, %s4
  %s7 = scalar_select 0, %s6, %s4
  // Predicated region
  $region2: #{deeplabv3plus_forward.6} parent=0 // pred_check
    _
  $region3: #{deeplabv3plus_forward.6} parent=0 // pred_check_branch
    %9 = sbr.rel (0) target = $region5
  $region4: #{deeplabv3plus_forward.6} parent=0 // pred_region
    _
  $region5: #{deeplabv3plus_forward.6} parent=0 // pred_fallthru
    _
  // Predicated region
  $region6: #{deeplabv3plus_forward.6} parent=0 // pred_check
    _
  $region7: #{deeplabv3plus_forward.6} parent=0 // pred_check_branch
    %11 = sbr.rel (0) target = $region9
  $region8: #{deeplabv3plus_forward.6} parent=0 // pred_region
    _
  $region9: #{deeplabv3plus_forward.6} parent=0 // pred_fallthru
    _
  // Predicated region
  $region10: #{deeplabv3plus_forward.6} parent=0 // pred_check
    _
  $region11: #{deeplabv3plus_forward.6} parent=0 // pred_check_branch
    %13 = sbr.rel (0) target = $region13
  $region12: #{deeplabv3plus_forward.6} parent=0 // pred_region
    _
  $region13: #{deeplabv3plus_forward.6} parent=0 // pred_fallthru
    _
  %p15 = scmp.eq.s32.totalorder 0, 0
  // Predicated region
  $region14: #{deeplabv3plus_forward.6} parent=0 // pred_check
    %p16 = pneg %p15
  $region15: #{deeplabv3plus_forward.6} parent=0 // pred_check_branch
    %18 = sbr.rel (%p16) target = $region17
  $region16: #{deeplabv3plus_forward.6} parent=0 // pred_region
    %19 = vst [vmem:[#allocation2] sm:$0xff] 0.0
    %20 = vst [vmem:[#allocation2 + $0x8] sm:$0xff] 0.0
    %21 = vst [vmem:[#allocation2 + $0x10] sm:$0xff] 0.0
    %22 = vst [vmem:[#allocation2 + $0x18] sm:$0xff] 0.0
  $region17: #{deeplabv3plus_forward.6} parent=0 // pred_fallthru
    _
  %v23 = vld [vmem:[#allocation2] sm:$0xff]
  %v24 = vld [vmem:[#allocation2 + $0x8] sm:$0xff]
  %v25 = vld [vmem:[#allocation2 + $0x10] sm:$0xff]
  %v26 = vld [vmem:[#allocation2 + $0x18] sm:$0xff]
  %v27 = vld [vmem:[%s0] sm:$0xf]
  %v28 = vld [vmem:[%s0 + $0x4] sm:$0xf]
  %v29 = vld [vmem:[%s0 + $0x8] sm:$0xf]
  %v30 = vld [vmem:[%s0 + $0xc] sm:$0xf]
  %v31 = vld [vmem:[%s1] sm:$0xf]
  %v32 = vld [vmem:[%s1 + $0x4] sm:$0xf]
  %v33 = vld [vmem:[%s1 + $0x8] sm:$0xf]
  %v34 = vld [vmem:[%s1 + $0xc] sm:$0xf]
  %v35 = vld [vmem:[%s1 + $0x10] sm:$0xf]
  %v36 = vld [vmem:[%s1 + $0x14] sm:$0xf]
  %v37 = vld [vmem:[%s1 + $0x18] sm:$0xf]
  %v38 = vld [vmem:[%s1 + $0x1c] sm:$0xf]
  %v39 = vld [vmem:[%s1 + $0x20] sm:$0xf]
  %v40 = vld [vmem:[%s1 + $0x24] sm:$0xf]
  %v41 = vld [vmem:[%s1 + $0x28] sm:$0xf]
  %v42 = vld [vmem:[%s1 + $0x2c] sm:$0xf]
  %v43 = vld [vmem:[%s1 + $0x30] sm:$0xf]
  %v44 = vld [vmem:[%s1 + $0x34] sm:$0xf]
  %v45 = vld [vmem:[%s1 + $0x38] sm:$0xf]
  %v46 = vld [vmem:[%s1 + $0x3c] sm:$0xf]
  %v51 = vunpack.c.l.b16 %v27
  %v52 = vunpack.c.l.b16 %v28
  %v53 = vunpack.c.l.b16 %v29
  %v54 = vunpack.c.l.b16 %v30
  %v55 = vpack.c.b16 %v52, %v51
  %v56 = vpack.c.b16 %v54, %v53
  %v75 = vunpack.c.l.b16 %v31
  %v76 = vunpack.c.l.b16 %v32
  %v77 = vunpack.c.l.b16 %v33
  %v78 = vunpack.c.l.b16 %v34
  %v79 = vunpack.c.l.b16 %v35
  %v80 = vunpack.c.l.b16 %v36
  %v81 = vunpack.c.l.b16 %v37
  %v82 = vunpack.c.l.b16 %v38
  %v83 = vunpack.c.l.b16 %v39
  %v84 = vunpack.c.l.b16 %v40
  %v85 = vunpack.c.l.b16 %v41
  %v86 = vunpack.c.l.b16 %v42
  %v87 = vunpack.c.l.b16 %v43
  %v88 = vunpack.c.l.b16 %v44
  %v89 = vunpack.c.l.b16 %v45
  %v90 = vunpack.c.l.b16 %v46
  %v91 = vpack.c.b16 %v76, %v75
  %v92 = vpack.c.b16 %v78, %v77
  %v93 = vpack.c.b16 %v80, %v79
  %v94 = vpack.c.b16 %v82, %v81
  %v95 = vpack.c.b16 %v84, %v83
  %v96 = vpack.c.b16 %v86, %v85
  %v97 = vpack.c.b16 %v88, %v87
  %v98 = vpack.c.b16 %v90, %v89
  %107 = vmatprep.subr.bf16.mxu0 0
  %108 = vmatpush1.bf16.msra.mxu0 %v91
  %109 = vmatprep.subr.bf16.mxu0 0
  %110 = vmatpush1.bf16.msra.mxu0 %v92
  %111 = vmatprep.subr.bf16.mxu0 0
  %112 = vmatpush1.bf16.msra.mxu0 %v93
  %113 = vmatprep.subr.bf16.mxu0 0
  %114 = vmatpush1.bf16.msra.mxu0 %v94
  %115 = vmatprep.subr.bf16.mxu0 0
  %116 = vmatpush1.bf16.msra.mxu0 %v95
  %117 = vmatprep.subr.bf16.mxu0 0
  %118 = vmatpush1.bf16.msra.mxu0 %v96
  %119 = vmatprep.subr.bf16.mxu0 0
  %120 = vmatpush1.bf16.msra.mxu0 %v97
  %121 = vmatprep.subr.bf16.mxu0 0
  %122 = vmatpush1.bf16.msra.mxu0 %v98
  %123 = vmatprep.subr.bf16.mxu0 0
  %124 = vmatpush1.bf16.msra.mxu0 0
  %125 = vmatprep.subr.bf16.mxu0 0
  %126 = vmatpush1.bf16.msra.mxu0 0
  %127 = vmatprep.subr.bf16.mxu0 0
  %128 = vmatpush1.bf16.msra.mxu0 0
  %129 = vmatprep.subr.bf16.mxu0 0
  %130 = vmatpush1.bf16.msra.mxu0 0
  %131 = vmatprep.subr.bf16.mxu0 0
  %132 = vmatpush1.bf16.msra.mxu0 0
  %133 = vmatprep.subr.bf16.mxu0 0
  %134 = vmatpush1.bf16.msra.mxu0 0
  %135 = vmatprep.subr.bf16.mxu0 0
  %136 = vmatpush1.bf16.msra.mxu0 0
  %137 = vmatprep.subr.bf16.mxu0 0
  %138 = vmatpush1.bf16.msra.mxu0 0
  %139 = vmatprep.mubr.bf16.mxu0 0
  %140 = vmatmul.mubr.bf16.gmra.mrb[0].mxu0 %v55
  %v141 = vpop.f32.mrb[0].mxu0
  %v142 = vadd.f32 0.0, %v141
  %v143 = vpop.f32.mrb[0].mxu0
  %v144 = vpop.f32.mrb[0].mxu0
  %v145 = vadd.f32 0.0, %v144
  %v146 = vpop.f32.mrb[0].mxu0
  %147 = vmatprep.mubr.bf16.mxu0 0
  %148 = vmatmul.mubr.bf16.gmra.mrb[0].mxu0 %v56
  %v149 = vpop.f32.mrb[0].mxu0
  %v150 = vadd.f32 0.0, %v149
  %v151 = vpop.f32.mrb[0].mxu0
  %v152 = vpop.f32.mrb[0].mxu0
  %v153 = vadd.f32 0.0, %v152
  %v154 = vpop.f32.mrb[0].mxu0
  %155 = vdwg.mxu0
  %v156 = vadd.f32 %v23, %v142
  %v157 = vadd.f32 %v24, %v145
  %v158 = vadd.f32 %v25, %v150
  %v159 = vadd.f32 %v26, %v153
  %160 = vst [vmem:[#allocation2] sm:$0xff] %v156
  %161 = vst [vmem:[#allocation2 + $0x8] sm:$0xff] %v157
  %162 = vst [vmem:[#allocation2 + $0x10] sm:$0xff] %v158
  %163 = vst [vmem:[#allocation2 + $0x18] sm:$0xff] %v159
  // Predicated region
  $region18: #{deeplabv3plus_forward.6} parent=0 // pred_check
    %p164 = pneg %p15
  $region19: #{deeplabv3plus_forward.6} parent=0 // pred_check_branch
    %166 = sbr.rel (%p164) target = $region21
  $region20: #{deeplabv3plus_forward.6} parent=0 // pred_region
    %v167 = vld [vmem:[#allocation2] sm:$0xff]
    %v168 = vld [vmem:[#allocation2 + $0x8] sm:$0xff]
    %v169 = vld [vmem:[#allocation2 + $0x10] sm:$0xff]
    %v170 = vld [vmem:[#allocation2 + $0x18] sm:$0xff]
    %v171 = vld [vmem:[%s2] sm:$0x1]
    %v173 = vlaneseq
    %v174 = vshrl.u32 %v173, 7
    %v175 = vsub.s32 0, %v174
    %v176 = vrot.slane %v171, %v175
    %v178 = vadd.f32 %v167, %v176
    %v179 = vadd.f32 %v168, %v176
    %v180 = vadd.f32 %v169, %v176
    %v181 = vadd.f32 %v170, %v176
    %v182 = vmax.f32 %v178, 0.0
    %v183 = vmax.f32 %v179, 0.0
    %v184 = vmax.f32 %v180, 0.0
    %v185 = vmax.f32 %v181, 0.0
    %v186 = vpack.c.bf16 %v183, %v182
    %v187 = vpack.c.bf16 %v185, %v184
    %v190 = vunpack.c.l.b16 %v186
    %v191 = vunpack.c.h.b16 %v186
    %v192 = vunpack.c.l.b16 %v187
    %v193 = vunpack.c.h.b16 %v187
    %v194 = vpack.c.b16 %v190, %v190
    %v195 = vpack.c.b16 %v191, %v191
    %v196 = vpack.c.b16 %v192, %v192
    %v197 = vpack.c.b16 %v193, %v193
    %202 = vst [vmem:[%s3] sm:$0xf] %v194
    %203 = vst [vmem:[%s3 + $0x4] sm:$0xf] %v195
    %204 = vst [vmem:[%s3 + $0x8] sm:$0xf] %v196
    %205 = vst [vmem:[%s3 + $0xc] sm:$0xf] %v197
  $region21: #{deeplabv3plus_forward.6} parent=0 // pred_fallthru
    _
  // Predicated region
  $region22: #{deeplabv3plus_forward.6} parent=0 // pred_check
    _
  $region23: #{deeplabv3plus_forward.6} parent=0 // pred_check_branch
    %207 = sbr.rel (0) target = $region25
  $region24: #{deeplabv3plus_forward.6} parent=0 // pred_region
    _
  $region25: #{deeplabv3plus_forward.6} parent=0 // pred_fallthru
    _
  // Predicated region
  $region26: #{deeplabv3plus_forward.6} parent=0 // pred_check
    _
  $region27: #{deeplabv3plus_forward.6} parent=0 // pred_check_branch
    %209 = sbr.rel (0) target = $region29
  $region28: #{deeplabv3plus_forward.6} parent=0 // pred_region
    _
  $region29: #{deeplabv3plus_forward.6} parent=0 // pred_fallthru
    _

// kernel: deeplabv3plus_forward.7
$region0: #{deeplabv3plus_forward.7}
  #allocation0 [shape = 'u32[]', space=smem, size = 0x4, offset = 0x4, fixed_abs, tag = 'smem constant byte address 0x4 - core index']
  #allocation1 [shape = 'u32[144,128]{1,0:T(1,128)}', space=vmem, size = 0x12000, scoped, tag = 'internal scratch']
  #allocation2 [shape = 'f32[32,128]{1,0:T(8,128)}', space=vmem, size = 0x4000, scoped, tag = 'scratch operand']
  %s0 = inlined_call_operand.vmem [shape: bf16[32,256], index: 0, kind: input, shape index: {}]
  %s1 = inlined_call_operand.vmem [shape: bf16[256,128], index: 1, kind: input, shape index: {}]
  %s2 = inlined_call_operand.vmem [shape: f32[1,128], index: 2, kind: input, shape index: {}]
  %s3 = inlined_call_operand.vmem [shape: bf16[32,128], index: 3, kind: output, shape index: {}]
  %s4 = sld [smem:[#allocation0]]
  $region30: #{deeplabv3plus_forward.7} parent=0
    _
  %s6 = ssub.s32 1, %s4
  %s7 = scalar_select 0, %s6, %s4
  // Predicated region
  $region2: #{deeplabv3plus_forward.7} parent=0 // pred_check
    _
  $region3: #{deeplabv3plus_forward.7} parent=0 // pred_check_branch
    %9 = sbr.rel (0) target = $region5
  $region4: #{deeplabv3plus_forward.7} parent=0 // pred_region
    _
  $region5: #{deeplabv3plus_forward.7} parent=0 // pred_fallthru
    _
  // Predicated region
  $region6: #{deeplabv3plus_forward.7} parent=0 // pred_check
    _
  $region7: #{deeplabv3plus_forward.7} parent=0 // pred_check_branch
    %11 = sbr.rel (0) target = $region9
  $region8: #{deeplabv3plus_forward.7} parent=0 // pred_region
    _
  $region9: #{deeplabv3plus_forward.7} parent=0 // pred_fallthru
    _
  // Predicated region
  $region10: #{deeplabv3plus_forward.7} parent=0 // pred_check
    _
  $region11: #{deeplabv3plus_forward.7} parent=0 // pred_check_branch
    %13 = sbr.rel (0) target = $region13
  $region12: #{deeplabv3plus_forward.7} parent=0 // pred_region
    _
  $region13: #{deeplabv3plus_forward.7} parent=0 // pred_fallthru
    _
  %p15 = scmp.eq.s32.totalorder 0, 0
  // Predicated region
  $region14: #{deeplabv3plus_forward.7} parent=0 // pred_check
    %p16 = pneg %p15
  $region15: #{deeplabv3plus_forward.7} parent=0 // pred_check_branch
    %18 = sbr.rel (%p16) target = $region17
  $region16: #{deeplabv3plus_forward.7} parent=0 // pred_region
    %19 = vst [vmem:[#allocation2] sm:$0xff] 0.0
    %20 = vst [vmem:[#allocation2 + $0x8] sm:$0xff] 0.0
    %21 = vst [vmem:[#allocation2 + $0x10] sm:$0xff] 0.0
    %22 = vst [vmem:[#allocation2 + $0x18] sm:$0xff] 0.0
  $region17: #{deeplabv3plus_forward.7} parent=0 // pred_fallthru
    _
  %v23 = vld [vmem:[#allocation2] sm:$0xff]
  %v24 = vld [vmem:[#allocation2 + $0x8] sm:$0xff]
  %v25 = vld [vmem:[#allocation2 + $0x10] sm:$0xff]
  %v26 = vld [vmem:[#allocation2 + $0x18] sm:$0xff]
  %v27 = vld [vmem:[%s0] sm:$0xff]
  %v28 = vld [vmem:[%s0 + $0x8] sm:$0xff]
  %v29 = vld [vmem:[%s0 + $0x10] sm:$0xff]
  %v30 = vld [vmem:[%s0 + $0x18] sm:$0xff]
  %v31 = vld [vmem:[%s1] sm:$0xf]
  %v32 = vld [vmem:[%s1 + $0x4] sm:$0xf]
  %v33 = vld [vmem:[%s1 + $0x8] sm:$0xf]
  %v34 = vld [vmem:[%s1 + $0xc] sm:$0xf]
  %v35 = vld [vmem:[%s1 + $0x10] sm:$0xf]
  %v36 = vld [vmem:[%s1 + $0x14] sm:$0xf]
  %v37 = vld [vmem:[%s1 + $0x18] sm:$0xf]
  %v38 = vld [vmem:[%s1 + $0x1c] sm:$0xf]
  %v39 = vld [vmem:[%s1 + $0x20] sm:$0xf]
  %v40 = vld [vmem:[%s1 + $0x24] sm:$0xf]
  %v41 = vld [vmem:[%s1 + $0x28] sm:$0xf]
  %v42 = vld [vmem:[%s1 + $0x2c] sm:$0xf]
  %v43 = vld [vmem:[%s1 + $0x30] sm:$0xf]
  %v44 = vld [vmem:[%s1 + $0x34] sm:$0xf]
  %v45 = vld [vmem:[%s1 + $0x38] sm:$0xf]
  %v46 = vld [vmem:[%s1 + $0x3c] sm:$0xf]
  %v47 = vld [vmem:[%s1 + $0x40] sm:$0xf]
  %v48 = vld [vmem:[%s1 + $0x44] sm:$0xf]
  %v49 = vld [vmem:[%s1 + $0x48] sm:$0xf]
  %v50 = vld [vmem:[%s1 + $0x4c] sm:$0xf]
  %v51 = vld [vmem:[%s1 + $0x50] sm:$0xf]
  %v52 = vld [vmem:[%s1 + $0x54] sm:$0xf]
  %v53 = vld [vmem:[%s1 + $0x58] sm:$0xf]
  %v54 = vld [vmem:[%s1 + $0x5c] sm:$0xf]
  %v55 = vld [vmem:[%s1 + $0x60] sm:$0xf]
  %v56 = vld [vmem:[%s1 + $0x64] sm:$0xf]
  %v57 = vld [vmem:[%s1 + $0x68] sm:$0xf]
  %v58 = vld [vmem:[%s1 + $0x6c] sm:$0xf]
  %v59 = vld [vmem:[%s1 + $0x70] sm:$0xf]
  %v60 = vld [vmem:[%s1 + $0x74] sm:$0xf]
  %v61 = vld [vmem:[%s1 + $0x78] sm:$0xf]
  %v62 = vld [vmem:[%s1 + $0x7c] sm:$0xf]
  %v67 = vunpack.c.l.b16 %v27
  %v68 = vunpack.c.h.b16 %v27
  %v69 = vunpack.c.l.b16 %v28
  %v70 = vunpack.c.h.b16 %v28
  %v71 = vunpack.c.l.b16 %v29
  %v72 = vunpack.c.h.b16 %v29
  %v73 = vunpack.c.l.b16 %v30
  %v74 = vunpack.c.h.b16 %v30
  %v75 = vpack.c.b16 %v69, %v67
  %v76 = vpack.c.b16 %v70, %v68
  %v77 = vpack.c.b16 %v73, %v71
  %v78 = vpack.c.b16 %v74, %v72
  %v115 = vunpack.c.l.b16 %v31
  %v116 = vunpack.c.l.b16 %v32
  %v117 = vunpack.c.l.b16 %v33
  %v118 = vunpack.c.l.b16 %v34
  %v119 = vunpack.c.l.b16 %v35
  %v120 = vunpack.c.l.b16 %v36
  %v121 = vunpack.c.l.b16 %v37
  %v122 = vunpack.c.l.b16 %v38
  %v123 = vunpack.c.l.b16 %v39
  %v124 = vunpack.c.l.b16 %v40
  %v125 = vunpack.c.l.b16 %v41
  %v126 = vunpack.c.l.b16 %v42
  %v127 = vunpack.c.l.b16 %v43
  %v128 = vunpack.c.l.b16 %v44
  %v129 = vunpack.c.l.b16 %v45
  %v130 = vunpack.c.l.b16 %v46
  %v131 = vunpack.c.l.b16 %v47
  %v132 = vunpack.c.l.b16 %v48
  %v133 = vunpack.c.l.b16 %v49
  %v134 = vunpack.c.l.b16 %v50
  %v135 = vunpack.c.l.b16 %v51
  %v136 = vunpack.c.l.b16 %v52
  %v137 = vunpack.c.l.b16 %v53
  %v138 = vunpack.c.l.b16 %v54
  %v139 = vunpack.c.l.b16 %v55
  %v140 = vunpack.c.l.b16 %v56
  %v141 = vunpack.c.l.b16 %v57
  %v142 = vunpack.c.l.b16 %v58
  %v143 = vunpack.c.l.b16 %v59
  %v144 = vunpack.c.l.b16 %v60
  %v145 = vunpack.c.l.b16 %v61
  %v146 = vunpack.c.l.b16 %v62
  %v147 = vpack.c.b16 %v116, %v115
  %v148 = vpack.c.b16 %v118, %v117
  %v149 = vpack.c.b16 %v120, %v119
  %v150 = vpack.c.b16 %v122, %v121
  %v151 = vpack.c.b16 %v124, %v123
  %v152 = vpack.c.b16 %v126, %v125
  %v153 = vpack.c.b16 %v128, %v127
  %v154 = vpack.c.b16 %v130, %v129
  %v155 = vpack.c.b16 %v132, %v131
  %v156 = vpack.c.b16 %v134, %v133
  %v157 = vpack.c.b16 %v136, %v135
  %v158 = vpack.c.b16 %v138, %v137
  %v159 = vpack.c.b16 %v140, %v139
  %v160 = vpack.c.b16 %v142, %v141
  %v161 = vpack.c.b16 %v144, %v143
  %v162 = vpack.c.b16 %v146, %v145
  %179 = vmatprep.subr.bf16.mxu0 0
  %180 = vmatpush1.bf16.msra.mxu0 %v147
  %181 = vmatprep.subr.bf16.mxu0 0
  %182 = vmatpush1.bf16.msra.mxu0 %v148
  %183 = vmatprep.subr.bf16.mxu0 0
  %184 = vmatpush1.bf16.msra.mxu0 %v149
  %185 = vmatprep.subr.bf16.mxu0 0
  %186 = vmatpush1.bf16.msra.mxu0 %v150
  %187 = vmatprep.subr.bf16.mxu0 0
  %188 = vmatpush1.bf16.msra.mxu0 %v151
  %189 = vmatprep.subr.bf16.mxu0 0
  %190 = vmatpush1.bf16.msra.mxu0 %v152
  %191 = vmatprep.subr.bf16.mxu0 0
  %192 = vmatpush1.bf16.msra.mxu0 %v153
  %193 = vmatprep.subr.bf16.mxu0 0
  %194 = vmatpush1.bf16.msra.mxu0 %v154
  %195 = vmatprep.subr.bf16.mxu0 0
  %196 = vmatpush1.bf16.msra.mxu0 %v155
  %197 = vmatprep.subr.bf16.mxu0 0
  %198 = vmatpush1.bf16.msra.mxu0 %v156
  %199 = vmatprep.subr.bf16.mxu0 0
  %200 = vmatpush1.bf16.msra.mxu0 %v157
  %201 = vmatprep.subr.bf16.mxu0 0
  %202 = vmatpush1.bf16.msra.mxu0 %v158
  %203 = vmatprep.subr.bf16.mxu0 0
  %204 = vmatpush1.bf16.msra.mxu0 %v159
  %205 = vmatprep.subr.bf16.mxu0 0
  %206 = vmatpush1.bf16.msra.mxu0 %v160
  %207 = vmatprep.subr.bf16.mxu0 0
  %208 = vmatpush1.bf16.msra.mxu0 %v161
  %209 = vmatprep.subr.bf16.mxu0 0
  %210 = vmatpush1.bf16.msra.mxu0 %v162
  %211 = vmatprep.mubr.bf16.mxu0 %v76
  %212 = vmatmul.mubr.bf16.gmra.mrb[0].mxu0 %v75
  %v213 = vpop.f32.mrb[0].mxu0
  %v214 = vadd.f32 0.0, %v213
  %v215 = vpop.f32.mrb[0].mxu0
  %v216 = vpop.f32.mrb[0].mxu0
  %v217 = vadd.f32 0.0, %v216
  %v218 = vpop.f32.mrb[0].mxu0
  %219 = vmatprep.mubr.bf16.mxu0 %v78
  %220 = vmatmul.mubr.bf16.gmra.mrb[0].mxu0 %v77
  %v221 = vpop.f32.mrb[0].mxu0
  %v222 = vadd.f32 0.0, %v221
  %v223 = vpop.f32.mrb[0].mxu0
  %v224 = vpop.f32.mrb[0].mxu0
  %v225 = vadd.f32 0.0, %v224
  %v226 = vpop.f32.mrb[0].mxu0
  %227 = vdwg.mxu0
  %v228 = vadd.f32 %v23, %v214
  %v229 = vadd.f32 %v24, %v217
  %v230 = vadd.f32 %v25, %v222
  %v231 = vadd.f32 %v26, %v225
  %232 = vst [vmem:[#allocation2] sm:$0xff] %v228
  %233 = vst [vmem:[#allocation2 + $0x8] sm:$0xff] %v229
  %234 = vst [vmem:[#allocation2 + $0x10] sm:$0xff] %v230
  %235 = vst [vmem:[#allocation2 + $0x18] sm:$0xff] %v231
  // Predicated region
  $region18: #{deeplabv3plus_forward.7} parent=0 // pred_check
    %p236 = pneg %p15
  $region19: #{deeplabv3plus_forward.7} parent=0 // pred_check_branch
    %238 = sbr.rel (%p236) target = $region21
  $region20: #{deeplabv3plus_forward.7} parent=0 // pred_region
    %v239 = vld [vmem:[#allocation2] sm:$0xff]
    %v240 = vld [vmem:[#allocation2 + $0x8] sm:$0xff]
    %v241 = vld [vmem:[#allocation2 + $0x10] sm:$0xff]
    %v242 = vld [vmem:[#allocation2 + $0x18] sm:$0xff]
    %v243 = vld [vmem:[%s2] sm:$0x1]
    %v245 = vlaneseq
    %v246 = vshrl.u32 %v245, 7
    %v247 = vsub.s32 0, %v246
    %v248 = vrot.slane %v243, %v247
    %v250 = vadd.f32 %v239, %v248
    %v251 = vadd.f32 %v240, %v248
    %v252 = vadd.f32 %v241, %v248
    %v253 = vadd.f32 %v242, %v248
    %v254 = vmax.f32 %v250, 0.0
    %v255 = vmax.f32 %v251, 0.0
    %v256 = vmax.f32 %v252, 0.0
    %v257 = vmax.f32 %v253, 0.0
    %v258 = vpack.c.bf16 %v255, %v254
    %v259 = vpack.c.bf16 %v257, %v256
    %v262 = vunpack.c.l.b16 %v258
    %v263 = vunpack.c.h.b16 %v258
    %v264 = vunpack.c.l.b16 %v259
    %v265 = vunpack.c.h.b16 %v259
    %v266 = vpack.c.b16 %v262, %v262
    %v267 = vpack.c.b16 %v263, %v263
    %v268 = vpack.c.b16 %v264, %v264
    %v269 = vpack.c.b16 %v265, %v265
    %274 = vst [vmem:[%s3] sm:$0xf] %v266
    %275 = vst [vmem:[%s3 + $0x4] sm:$0xf] %v267
    %276 = vst [vmem:[%s3 + $0x8] sm:$0xf] %v268
    %277 = vst [vmem:[%s3 + $0xc] sm:$0xf] %v269
  $region21: #{deeplabv3plus_forward.7} parent=0 // pred_fallthru
    _
  // Predicated region
  $region22: #{deeplabv3plus_forward.7} parent=0 // pred_check
    _
  $region23: #{deeplabv3plus_forward.7} parent=0 // pred_check_branch
    %279 = sbr.rel (0) target = $region25
  $region24: #{deeplabv3plus_forward.7} parent=0 // pred_region
    _
  $region25: #{deeplabv3plus_forward.7} parent=0 // pred_fallthru
    _
  // Predicated region
  $region26: #{deeplabv3plus_forward.7} parent=0 // pred_check
    _
  $region27: #{deeplabv3plus_forward.7} parent=0 // pred_check_branch
    %281 = sbr.rel (0) target = $region29
  $region28: #{deeplabv3plus_forward.7} parent=0 // pred_region
    _
  $region29: #{deeplabv3plus_forward.7} parent=0 // pred_fallthru
    _

// kernel: deeplabv3plus_forward.8
$region0: #{deeplabv3plus_forward.8}
  #allocation0 [shape = 'u32[]', space=smem, size = 0x4, offset = 0x4, fixed_abs, tag = 'smem constant byte address 0x4 - core index']
  #allocation1 [shape = 'u32[144,128]{1,0:T(1,128)}', space=vmem, size = 0x12000, scoped, tag = 'internal scratch']
  #allocation2 [shape = 'f32[32,128]{1,0:T(8,128)}', space=vmem, size = 0x4000, scoped, tag = 'scratch operand']
  %s0 = inlined_call_operand.vmem [shape: bf16[32,128], index: 0, kind: input, shape index: {}]
  %s1 = inlined_call_operand.vmem [shape: bf16[128,128], index: 1, kind: input, shape index: {}]
  %s2 = inlined_call_operand.vmem [shape: f32[1,128], index: 2, kind: input, shape index: {}]
  %s3 = inlined_call_operand.vmem [shape: bf16[32,128], index: 3, kind: output, shape index: {}]
  %s4 = sld [smem:[#allocation0]]
  $region30: #{deeplabv3plus_forward.8} parent=0
    _
  %s6 = ssub.s32 1, %s4
  %s7 = scalar_select 0, %s6, %s4
  // Predicated region
  $region2: #{deeplabv3plus_forward.8} parent=0 // pred_check
    _
  $region3: #{deeplabv3plus_forward.8} parent=0 // pred_check_branch
    %9 = sbr.rel (0) target = $region5
  $region4: #{deeplabv3plus_forward.8} parent=0 // pred_region
    _
  $region5: #{deeplabv3plus_forward.8} parent=0 // pred_fallthru
    _
  // Predicated region
  $region6: #{deeplabv3plus_forward.8} parent=0 // pred_check
    _
  $region7: #{deeplabv3plus_forward.8} parent=0 // pred_check_branch
    %11 = sbr.rel (0) target = $region9
  $region8: #{deeplabv3plus_forward.8} parent=0 // pred_region
    _
  $region9: #{deeplabv3plus_forward.8} parent=0 // pred_fallthru
    _
  // Predicated region
  $region10: #{deeplabv3plus_forward.8} parent=0 // pred_check
    _
  $region11: #{deeplabv3plus_forward.8} parent=0 // pred_check_branch
    %13 = sbr.rel (0) target = $region13
  $region12: #{deeplabv3plus_forward.8} parent=0 // pred_region
    _
  $region13: #{deeplabv3plus_forward.8} parent=0 // pred_fallthru
    _
  %p15 = scmp.eq.s32.totalorder 0, 0
  // Predicated region
  $region14: #{deeplabv3plus_forward.8} parent=0 // pred_check
    %p16 = pneg %p15
  $region15: #{deeplabv3plus_forward.8} parent=0 // pred_check_branch
    %18 = sbr.rel (%p16) target = $region17
  $region16: #{deeplabv3plus_forward.8} parent=0 // pred_region
    %19 = vst [vmem:[#allocation2] sm:$0xff] 0.0
    %20 = vst [vmem:[#allocation2 + $0x8] sm:$0xff] 0.0
    %21 = vst [vmem:[#allocation2 + $0x10] sm:$0xff] 0.0
    %22 = vst [vmem:[#allocation2 + $0x18] sm:$0xff] 0.0
  $region17: #{deeplabv3plus_forward.8} parent=0 // pred_fallthru
    _
  %v23 = vld [vmem:[#allocation2] sm:$0xff]
  %v24 = vld [vmem:[#allocation2 + $0x8] sm:$0xff]
  %v25 = vld [vmem:[#allocation2 + $0x10] sm:$0xff]
  %v26 = vld [vmem:[#allocation2 + $0x18] sm:$0xff]
  %v27 = vld [vmem:[%s0] sm:$0xf]
  %v28 = vld [vmem:[%s0 + $0x4] sm:$0xf]
  %v29 = vld [vmem:[%s0 + $0x8] sm:$0xf]
  %v30 = vld [vmem:[%s0 + $0xc] sm:$0xf]
  %v31 = vld [vmem:[%s1] sm:$0xf]
  %v32 = vld [vmem:[%s1 + $0x4] sm:$0xf]
  %v33 = vld [vmem:[%s1 + $0x8] sm:$0xf]
  %v34 = vld [vmem:[%s1 + $0xc] sm:$0xf]
  %v35 = vld [vmem:[%s1 + $0x10] sm:$0xf]
  %v36 = vld [vmem:[%s1 + $0x14] sm:$0xf]
  %v37 = vld [vmem:[%s1 + $0x18] sm:$0xf]
  %v38 = vld [vmem:[%s1 + $0x1c] sm:$0xf]
  %v39 = vld [vmem:[%s1 + $0x20] sm:$0xf]
  %v40 = vld [vmem:[%s1 + $0x24] sm:$0xf]
  %v41 = vld [vmem:[%s1 + $0x28] sm:$0xf]
  %v42 = vld [vmem:[%s1 + $0x2c] sm:$0xf]
  %v43 = vld [vmem:[%s1 + $0x30] sm:$0xf]
  %v44 = vld [vmem:[%s1 + $0x34] sm:$0xf]
  %v45 = vld [vmem:[%s1 + $0x38] sm:$0xf]
  %v46 = vld [vmem:[%s1 + $0x3c] sm:$0xf]
  %v51 = vunpack.c.l.b16 %v27
  %v52 = vunpack.c.l.b16 %v28
  %v53 = vunpack.c.l.b16 %v29
  %v54 = vunpack.c.l.b16 %v30
  %v55 = vpack.c.b16 %v52, %v51
  %v56 = vpack.c.b16 %v54, %v53
  %v75 = vunpack.c.l.b16 %v31
  %v76 = vunpack.c.l.b16 %v32
  %v77 = vunpack.c.l.b16 %v33
  %v78 = vunpack.c.l.b16 %v34
  %v79 = vunpack.c.l.b16 %v35
  %v80 = vunpack.c.l.b16 %v36
  %v81 = vunpack.c.l.b16 %v37
  %v82 = vunpack.c.l.b16 %v38
  %v83 = vunpack.c.l.b16 %v39
  %v84 = vunpack.c.l.b16 %v40
  %v85 = vunpack.c.l.b16 %v41
  %v86 = vunpack.c.l.b16 %v42
  %v87 = vunpack.c.l.b16 %v43
  %v88 = vunpack.c.l.b16 %v44
  %v89 = vunpack.c.l.b16 %v45
  %v90 = vunpack.c.l.b16 %v46
  %v91 = vpack.c.b16 %v76, %v75
  %v92 = vpack.c.b16 %v78, %v77
  %v93 = vpack.c.b16 %v80, %v79
  %v94 = vpack.c.b16 %v82, %v81
  %v95 = vpack.c.b16 %v84, %v83
  %v96 = vpack.c.b16 %v86, %v85
  %v97 = vpack.c.b16 %v88, %v87
  %v98 = vpack.c.b16 %v90, %v89
  %107 = vmatprep.subr.bf16.mxu0 0
  %108 = vmatpush1.bf16.msra.mxu0 %v91
  %109 = vmatprep.subr.bf16.mxu0 0
  %110 = vmatpush1.bf16.msra.mxu0 %v92
  %111 = vmatprep.subr.bf16.mxu0 0
  %112 = vmatpush1.bf16.msra.mxu0 %v93
  %113 = vmatprep.subr.bf16.mxu0 0
  %114 = vmatpush1.bf16.msra.mxu0 %v94
  %115 = vmatprep.subr.bf16.mxu0 0
  %116 = vmatpush1.bf16.msra.mxu0 %v95
  %117 = vmatprep.subr.bf16.mxu0 0
  %118 = vmatpush1.bf16.msra.mxu0 %v96
  %119 = vmatprep.subr.bf16.mxu0 0
  %120 = vmatpush1.bf16.msra.mxu0 %v97
  %121 = vmatprep.subr.bf16.mxu0 0
  %122 = vmatpush1.bf16.msra.mxu0 %v98
  %123 = vmatprep.subr.bf16.mxu0 0
  %124 = vmatpush1.bf16.msra.mxu0 0
  %125 = vmatprep.subr.bf16.mxu0 0
  %126 = vmatpush1.bf16.msra.mxu0 0
  %127 = vmatprep.subr.bf16.mxu0 0
  %128 = vmatpush1.bf16.msra.mxu0 0
  %129 = vmatprep.subr.bf16.mxu0 0
  %130 = vmatpush1.bf16.msra.mxu0 0
  %131 = vmatprep.subr.bf16.mxu0 0
  %132 = vmatpush1.bf16.msra.mxu0 0
  %133 = vmatprep.subr.bf16.mxu0 0
  %134 = vmatpush1.bf16.msra.mxu0 0
  %135 = vmatprep.subr.bf16.mxu0 0
  %136 = vmatpush1.bf16.msra.mxu0 0
  %137 = vmatprep.subr.bf16.mxu0 0
  %138 = vmatpush1.bf16.msra.mxu0 0
  %139 = vmatprep.mubr.bf16.mxu0 0
  %140 = vmatmul.mubr.bf16.gmra.mrb[0].mxu0 %v55
  %v141 = vpop.f32.mrb[0].mxu0
  %v142 = vadd.f32 0.0, %v141
  %v143 = vpop.f32.mrb[0].mxu0
  %v144 = vpop.f32.mrb[0].mxu0
  %v145 = vadd.f32 0.0, %v144
  %v146 = vpop.f32.mrb[0].mxu0
  %147 = vmatprep.mubr.bf16.mxu0 0
  %148 = vmatmul.mubr.bf16.gmra.mrb[0].mxu0 %v56
  %v149 = vpop.f32.mrb[0].mxu0
  %v150 = vadd.f32 0.0, %v149
  %v151 = vpop.f32.mrb[0].mxu0
  %v152 = vpop.f32.mrb[0].mxu0
  %v153 = vadd.f32 0.0, %v152
  %v154 = vpop.f32.mrb[0].mxu0
  %155 = vdwg.mxu0
  %v156 = vadd.f32 %v23, %v142
  %v157 = vadd.f32 %v24, %v145
  %v158 = vadd.f32 %v25, %v150
  %v159 = vadd.f32 %v26, %v153
  %160 = vst [vmem:[#allocation2] sm:$0xff] %v156
  %161 = vst [vmem:[#allocation2 + $0x8] sm:$0xff] %v157
  %162 = vst [vmem:[#allocation2 + $0x10] sm:$0xff] %v158
  %163 = vst [vmem:[#allocation2 + $0x18] sm:$0xff] %v159
  // Predicated region
  $region18: #{deeplabv3plus_forward.8} parent=0 // pred_check
    %p164 = pneg %p15
  $region19: #{deeplabv3plus_forward.8} parent=0 // pred_check_branch
    %166 = sbr.rel (%p164) target = $region21
  $region20: #{deeplabv3plus_forward.8} parent=0 // pred_region
    %v167 = vld [vmem:[#allocation2] sm:$0xff]
    %v168 = vld [vmem:[#allocation2 + $0x8] sm:$0xff]
    %v169 = vld [vmem:[#allocation2 + $0x10] sm:$0xff]
    %v170 = vld [vmem:[#allocation2 + $0x18] sm:$0xff]
    %v171 = vld [vmem:[%s2] sm:$0x1]
    %v173 = vlaneseq
    %v174 = vshrl.u32 %v173, 7
    %v175 = vsub.s32 0, %v174
    %v176 = vrot.slane %v171, %v175
    %v178 = vadd.f32 %v167, %v176
    %v179 = vadd.f32 %v168, %v176
    %v180 = vadd.f32 %v169, %v176
    %v181 = vadd.f32 %v170, %v176
    %v182 = vpack.c.bf16 %v179, %v178
    %v183 = vpack.c.bf16 %v181, %v180
    %v186 = vunpack.c.l.b16 %v182
    %v187 = vunpack.c.h.b16 %v182
    %v188 = vunpack.c.l.b16 %v183
    %v189 = vunpack.c.h.b16 %v183
    %v190 = vpack.c.b16 %v186, %v186
    %v191 = vpack.c.b16 %v187, %v187
    %v192 = vpack.c.b16 %v188, %v188
    %v193 = vpack.c.b16 %v189, %v189
    %198 = vst [vmem:[%s3] sm:$0xf] %v190
    %199 = vst [vmem:[%s3 + $0x4] sm:$0xf] %v191
    %200 = vst [vmem:[%s3 + $0x8] sm:$0xf] %v192
    %201 = vst [vmem:[%s3 + $0xc] sm:$0xf] %v193
  $region21: #{deeplabv3plus_forward.8} parent=0 // pred_fallthru
    _
  // Predicated region
  $region22: #{deeplabv3plus_forward.8} parent=0 // pred_check
    _
  $region23: #{deeplabv3plus_forward.8} parent=0 // pred_check_branch
    %203 = sbr.rel (0) target = $region25
  $region24: #{deeplabv3plus_forward.8} parent=0 // pred_region
    _
  $region25: #{deeplabv3plus_forward.8} parent=0 // pred_fallthru
    _
  // Predicated region
  $region26: #{deeplabv3plus_forward.8} parent=0 // pred_check
    _
  $region27: #{deeplabv3plus_forward.8} parent=0 // pred_check_branch
    %205 = sbr.rel (0) target = $region29
  $region28: #{deeplabv3plus_forward.8} parent=0 // pred_region
    _
  $region29: #{deeplabv3plus_forward.8} parent=0 // pred_fallthru
    _

// kernel: deeplabv3plus_forward.9
$region0: #{deeplabv3plus_forward.9}
  #allocation0 [shape = 'u32[]', space=smem, size = 0x4, offset = 0x4, fixed_abs, tag = 'smem constant byte address 0x4 - core index']
  #allocation1 [shape = 'u32[144,128]{1,0:T(1,128)}', space=vmem, size = 0x12000, scoped, tag = 'internal scratch']
  #allocation2 [shape = 'f32[8,256]{1,0:T(8,128)}', space=vmem, size = 0x2000, scoped, tag = 'scratch operand']
  %s0 = inlined_call_operand.vmem [shape: bf16[8,128], index: 0, kind: input, shape index: {}]
  %s1 = inlined_call_operand.vmem [shape: bf16[128,256], index: 1, kind: input, shape index: {}]
  %s2 = inlined_call_operand.vmem [shape: f32[8,256], index: 2, kind: output, shape index: {}]
  %s3 = sld [smem:[#allocation0]]
  $region26: #{deeplabv3plus_forward.9} parent=0
    _
  %s5 = ssub.s32 1, %s3
  %s6 = scalar_select 0, %s5, %s3
  // Predicated region
  $region2: #{deeplabv3plus_forward.9} parent=0 // pred_check
    _
  $region3: #{deeplabv3plus_forward.9} parent=0 // pred_check_branch
    %8 = sbr.rel (0) target = $region5
  $region4: #{deeplabv3plus_forward.9} parent=0 // pred_region
    _
  $region5: #{deeplabv3plus_forward.9} parent=0 // pred_fallthru
    _
  // Predicated region
  $region6: #{deeplabv3plus_forward.9} parent=0 // pred_check
    _
  $region7: #{deeplabv3plus_forward.9} parent=0 // pred_check_branch
    %10 = sbr.rel (0) target = $region9
  $region8: #{deeplabv3plus_forward.9} parent=0 // pred_region
    _
  $region9: #{deeplabv3plus_forward.9} parent=0 // pred_fallthru
    _
  %p12 = scmp.eq.s32.totalorder 0, 0
  // Predicated region
  $region10: #{deeplabv3plus_forward.9} parent=0 // pred_check
    %p13 = pneg %p12
  $region11: #{deeplabv3plus_forward.9} parent=0 // pred_check_branch
    %15 = sbr.rel (%p13) target = $region13
  $region12: #{deeplabv3plus_forward.9} parent=0 // pred_region
    %16 = vst [vmem:[#allocation2] sm:$0xff] 0.0
    %17 = vst [vmem:[#allocation2 + $0x8] sm:$0xff] 0.0
  $region13: #{deeplabv3plus_forward.9} parent=0 // pred_fallthru
    _
  %v18 = vld [vmem:[#allocation2] sm:$0xff]
  %v19 = vld [vmem:[#allocation2 + $0x8] sm:$0xff]
  %v20 = vld [vmem:[%s0] sm:$0xf]
  %v21 = vld [vmem:[%s1] sm:$0xff]
  %v22 = vld [vmem:[%s1 + $0x8] sm:$0xff]
  %v23 = vld [vmem:[%s1 + $0x10] sm:$0xff]
  %v24 = vld [vmem:[%s1 + $0x18] sm:$0xff]
  %v25 = vld [vmem:[%s1 + $0x20] sm:$0xff]
  %v26 = vld [vmem:[%s1 + $0x28] sm:$0xff]
  %v27 = vld [vmem:[%s1 + $0x30] sm:$0xff]
  %v28 = vld [vmem:[%s1 + $0x38] sm:$0xff]
  %v29 = vld [vmem:[%s1 + $0x40] sm:$0xff]
  %v30 = vld [vmem:[%s1 + $0x48] sm:$0xff]
  %v31 = vld [vmem:[%s1 + $0x50] sm:$0xff]
  %v32 = vld [vmem:[%s1 + $0x58] sm:$0xff]
  %v33 = vld [vmem:[%s1 + $0x60] sm:$0xff]
  %v34 = vld [vmem:[%s1 + $0x68] sm:$0xff]
  %v35 = vld [vmem:[%s1 + $0x70] sm:$0xff]
  %v36 = vld [vmem:[%s1 + $0x78] sm:$0xff]
  %v53 = vunpack.c.l.b16 %v21
  %v54 = vunpack.c.h.b16 %v21
  %v55 = vunpack.c.l.b16 %v22
  %v56 = vunpack.c.h.b16 %v22
  %v57 = vunpack.c.l.b16 %v23
  %v58 = vunpack.c.h.b16 %v23
  %v59 = vunpack.c.l.b16 %v24
  %v60 = vunpack.c.h.b16 %v24
  %v61 = vunpack.c.l.b16 %v25
  %v62 = vunpack.c.h.b16 %v25
  %v63 = vunpack.c.l.b16 %v26
  %v64 = vunpack.c.h.b16 %v26
  %v65 = vunpack.c.l.b16 %v27
  %v66 = vunpack.c.h.b16 %v27
  %v67 = vunpack.c.l.b16 %v28
  %v68 = vunpack.c.h.b16 %v28
  %v69 = vunpack.c.l.b16 %v29
  %v70 = vunpack.c.h.b16 %v29
  %v71 = vunpack.c.l.b16 %v30
  %v72 = vunpack.c.h.b16 %v30
  %v73 = vunpack.c.l.b16 %v31
  %v74 = vunpack.c.h.b16 %v31
  %v75 = vunpack.c.l.b16 %v32
  %v76 = vunpack.c.h.b16 %v32
  %v77 = vunpack.c.l.b16 %v33
  %v78 = vunpack.c.h.b16 %v33
  %v79 = vunpack.c.l.b16 %v34
  %v80 = vunpack.c.h.b16 %v34
  %v81 = vunpack.c.l.b16 %v35
  %v82 = vunpack.c.h.b16 %v35
  %v83 = vunpack.c.l.b16 %v36
  %v84 = vunpack.c.h.b16 %v36
  %v85 = vpack.c.b16 %v55, %v53
  %v86 = vpack.c.b16 %v56, %v54
  %v87 = vpack.c.b16 %v59, %v57
  %v88 = vpack.c.b16 %v60, %v58
  %v89 = vpack.c.b16 %v63, %v61
  %v90 = vpack.c.b16 %v64, %v62
  %v91 = vpack.c.b16 %v67, %v65
  %v92 = vpack.c.b16 %v68, %v66
  %v93 = vpack.c.b16 %v71, %v69
  %v94 = vpack.c.b16 %v72, %v70
  %v95 = vpack.c.b16 %v75, %v73
  %v96 = vpack.c.b16 %v76, %v74
  %v97 = vpack.c.b16 %v79, %v77
  %v98 = vpack.c.b16 %v80, %v78
  %v99 = vpack.c.b16 %v83, %v81
  %v100 = vpack.c.b16 %v84, %v82
  %117 = vmatprep.subr.bf16.mxu0 %v86
  %118 = vmatpush1.bf16.msra.mxu0 %v85
  %119 = vmatprep.subr.bf16.mxu0 %v88
  %120 = vmatpush1.bf16.msra.mxu0 %v87
  %121 = vmatprep.subr.bf16.mxu0 %v90
  %122 = vmatpush1.bf16.msra.mxu0 %v89
  %123 = vmatprep.subr.bf16.mxu0 %v92
  %124 = vmatpush1.bf16.msra.mxu0 %v91
  %125 = vmatprep.subr.bf16.mxu0 %v94
  %126 = vmatpush1.bf16.msra.mxu0 %v93
  %127 = vmatprep.subr.bf16.mxu0 %v96
  %128 = vmatpush1.bf16.msra.mxu0 %v95
  %129 = vmatprep.subr.bf16.mxu0 %v98
  %130 = vmatpush1.bf16.msra.mxu0 %v97
  %131 = vmatprep.subr.bf16.mxu0 %v100
  %132 = vmatpush1.bf16.msra.mxu0 %v99
  %133 = vmatprep.subr.bf16.mxu0 0
  %134 = vmatpush1.bf16.msra.mxu0 0
  %135 = vmatprep.subr.bf16.mxu0 0
  %136 = vmatpush1.bf16.msra.mxu0 0
  %137 = vmatprep.subr.bf16.mxu0 0
  %138 = vmatpush1.bf16.msra.mxu0 0
  %139 = vmatprep.subr.bf16.mxu0 0
  %140 = vmatpush1.bf16.msra.mxu0 0
  %141 = vmatprep.subr.bf16.mxu0 0
  %142 = vmatpush1.bf16.msra.mxu0 0
  %143 = vmatprep.subr.bf16.mxu0 0
  %144 = vmatpush1.bf16.msra.mxu0 0
  %145 = vmatprep.subr.bf16.mxu0 0
  %146 = vmatpush1.bf16.msra.mxu0 0
  %147 = vmatprep.subr.bf16.mxu0 0
  %148 = vmatpush1.bf16.msra.mxu0 0
  %149 = vmatprep.mubr.bf16.mxu0 0
  %150 = vmatmul.mubr.bf16.gmra.mrb[0].mxu0 %v20
  %v151 = vpop.f32.mrb[0].mxu0
  %v152 = vadd.f32 0.0, %v151
  %v153 = vpop.f32.mrb[0].mxu0
  %v154 = vadd.f32 0.0, %v153
  %v155 = vpop.f32.mrb[0].mxu0
  %v156 = vpop.f32.mrb[0].mxu0
  %157 = vdwg.mxu0
  %v158 = vadd.f32 %v18, %v152
  %v159 = vadd.f32 %v19, %v154
  %160 = vst [vmem:[#allocation2] sm:$0xff] %v158
  %161 = vst [vmem:[#allocation2 + $0x8] sm:$0xff] %v159
  // Predicated region
  $region14: #{deeplabv3plus_forward.9} parent=0 // pred_check
    %p162 = pneg %p12
  $region15: #{deeplabv3plus_forward.9} parent=0 // pred_check_branch
    %164 = sbr.rel (%p162) target = $region17
  $region16: #{deeplabv3plus_forward.9} parent=0 // pred_region
    %v165 = vld [vmem:[#allocation2] sm:$0xff]
    %v166 = vld [vmem:[#allocation2 + $0x8] sm:$0xff]
    %167 = vst [vmem:[%s2] sm:$0xff] %v165
    %168 = vst [vmem:[%s2 + $0x8] sm:$0xff] %v166
  $region17: #{deeplabv3plus_forward.9} parent=0 // pred_fallthru
    _
  // Predicated region
  $region18: #{deeplabv3plus_forward.9} parent=0 // pred_check
    _
  $region19: #{deeplabv3plus_forward.9} parent=0 // pred_check_branch
    %170 = sbr.rel (0) target = $region21
  $region20: #{deeplabv3plus_forward.9} parent=0 // pred_region
    _
  $region21: #{deeplabv3plus_forward.9} parent=0 // pred_fallthru
    _
  // Predicated region
  $region22: #{deeplabv3plus_forward.9} parent=0 // pred_check
    _
  $region23: #{deeplabv3plus_forward.9} parent=0 // pred_check_branch
    %172 = sbr.rel (0) target = $region25
  $region24: #{deeplabv3plus_forward.9} parent=0 // pred_region
    _
  $region25: #{deeplabv3plus_forward.9} parent=0 // pred_fallthru
    _

</llo_original>
